<compile_context>
chip_gen: v6e
topology: v6e:2x2x1
jax: 0.10.0
libtpu: 0.0.40
codegen_flags: <defaults>
</compile_context>

<pallas_src>
import math
import numpy as np

import jax
import jax.numpy as jnp
from jax import lax
from jax.experimental import pallas as pl

# ---------------- tiny config (consistent with the PyTorch module) ----------------
B, T = 2, 8                 # batch, seq len
N = B * T                   # folded token count = 16
E = 64                      # emb_dim
H = 4                       # n_heads
KV = 2                      # n_kv_groups
D = E // H                  # head_dim = 16
GROUP = H // KV             # heads per kv group = 2
HID = 128                   # feedforward hidden_dim
VOCAB = 256                 # vocab_size (multiple of 128 -> lane-dense logits)
LAYERS = 2                  # n_layers
CTX = 32                    # context_length for rope tables
EPS = 1e-5
THETA = 10000.0
QKVW = E + 2 * KV * D       # packed qkv width = 128 (lane dense)


# ------------------------------- Pallas kernels -----------------------------------
def transformer_block_kernel(x_ref, cos_ref, sin_ref, rot_ref, bias_ref,
                             n1_ref, wqkv_ref, wo_ref, n2_ref, wgate_ref,
                             w3_ref, out_ref):
    x = x_ref[...]                                            # (N, E) batch folded
    # ---- RMSNorm 1 ----
    xn = x * lax.rsqrt(jnp.mean(x * x, axis=-1, keepdims=True) + EPS) * n1_ref[...]

    # ---- fused QKV projection: one lane-dense (N, 128) matmul ----
    qkv = jnp.dot(xn, wqkv_ref[...], preferred_element_type=jnp.float32)

    # ---- full-width RoPE: rotate-half as a block-diagonal sign-permutation matmul.
    #      Q cos/sin carry the 1/sqrt(D) attention scale; V region is (cos=1, sin=0).
    qkv = qkv * cos_ref[...] + jnp.dot(
        qkv, rot_ref[...], preferred_element_type=jnp.float32) * sin_ref[...]

    bias = bias_ref[...]                                      # (GROUP*N, N) additive mask
    wo = wo_ref[...]                                          # (E, E) = Wo^T

    attn = jnp.zeros((N, E), dtype=jnp.float32)
    for g in range(KV):                                       # static loop over kv groups
        # stack this group's heads along the sublane axis -> (GROUP*N, D)
        qg = jnp.concatenate(
            [qkv[:, (g * GROUP + j) * D:(g * GROUP + j + 1) * D] for j in range(GROUP)],
            axis=0)
        kg = qkv[:, E + g * D: E + (g + 1) * D]                        # (N, D)
        vg = qkv[:, E + KV * D + g * D: E + KV * D + (g + 1) * D]      # (N, D)

        # one score matmul + one PV matmul for the whole group (all heads, all batch)
        s = lax.dot_general(qg, kg, (((1,), (1,)), ((), ())),
                            preferred_element_type=jnp.float32) + bias
        s = s - jnp.max(s, axis=-1, keepdims=True)
        p = jnp.exp(s)
        p = p * pl.reciprocal(jnp.sum(p, axis=-1, keepdims=True), approx=True)
        og = jnp.dot(p, vg, preferred_element_type=jnp.float32)        # (GROUP*N, D)

        # fold the output projection per head (avoids a lane-concat of head outputs)
        for j in range(GROUP):
            h = g * GROUP + j
            attn = attn + jnp.dot(og[j * N:(j + 1) * N, :],
                                  wo[h * D:(h + 1) * D, :],
                                  preferred_element_type=jnp.float32)

    x1 = x + attn                                             # residual 1

    # ---- RMSNorm 2 + SwiGLU (fc1/fc2 fused into one 256-wide lane-dense matmul) ----
    xn2 = x1 * lax.rsqrt(jnp.mean(x1 * x1, axis=-1, keepdims=True) + EPS) * n2_ref[...]
    gate = jnp.dot(xn2, wgate_ref[...], preferred_element_type=jnp.float32)  # (N, 2*HID)
    a = gate[:, :HID]
    b = gate[:, HID:]
    ff = jnp.dot(a * jax.nn.sigmoid(a) * b, w3_ref[...],
                 preferred_element_type=jnp.float32)
    out_ref[...] = (x1 + ff).astype(out_ref.dtype)            # residual 2


def final_norm_head_kernel(x_ref, nf_ref, wout_ref, out_ref):
    x = x_ref[...]                                            # (N, E)
    xn = x * lax.rsqrt(jnp.mean(x * x, axis=-1, keepdims=True) + EPS) * nf_ref[...]
    out_ref[...] = jnp.dot(xn, wout_ref[...],
                           preferred_element_type=jnp.float32).astype(out_ref.dtype)


# ------------------------------ pallas wrappers ------------------------------------
def transformer_block_fast(x, p, c):
    # Single invocation, whole arrays resident in VMEM (weights ~0.2 MiB at toy size).
    # TODO(synk): at real Llama3 dims (E=4096, HID=14336) weights no longer fit VMEM
    # (esp. v7x 64 MiB): add a K-reduction grid axis with an f32 accumulator scratch,
    # pl.when init/finalize, and an explicit vmem_limit_bytes; optionally cast MXU
    # operands to bf16 on v6e/v7x.
    return pl.pallas_call(
        transformer_block_kernel,
        out_shape=jax.ShapeDtypeStruct((N, E), jnp.float32),
    )(x, c["cos"], c["sin"], c["rot"], c["mask"],
      p["n1"], p["wqkv"], p["wo_t"], p["n2"], p["wgate"], p["w3_t"])


def final_norm_head(x, nf, wout_t):
    return pl.pallas_call(
        final_norm_head_kernel,
        out_shape=jax.ShapeDtypeStruct((N, VOCAB), jnp.float32),
    )(x, nf, wout_t)


@jax.jit
def llama3_forward_pallas(in_idx, tok_emb, prepared_layers, consts, nf, wout_t):
    # TODO(synk): token-embedding gather (nn.Embedding) stays in XLA via jnp.take;
    # a Pallas scalar-prefetch gather has no win at this scale.
    x = jnp.take(tok_emb, in_idx.reshape(-1), axis=0)         # (B*T, E): batch folded once
    for p in prepared_layers:
        x = transformer_block_fast(x, p, consts)
    return final_norm_head(x, nf, wout_t).reshape(B, T, VOCAB)


# ------------------- one-time parameter packing / constant tables ------------------
def prepare_block_params(p):
    """Pack & transpose nn.Linear-layout weights ONCE (not per forward call)."""
    return {
        "n1": p["n1"].reshape(1, E),
        "n2": p["n2"].reshape(1, E),
        "wqkv": jnp.concatenate([p["wq"].T, p["wk"].T, p["wv"].T], axis=1),  # (E, 128)
        "wo_t": p["wo"].T,                                                   # (E, E)
        "wgate": jnp.concatenate([p["w1"].T, p["w2"].T], axis=1),            # (E, 256)
        "w3_t": p["w3"].T,                                                   # (HID, E)
    }


def build_constants(cos, sin):
    """RoPE tiles, rotate-half permutation matrix, and the batch-causal mask bias."""
    cos_t = np.asarray(cos[:T], dtype=np.float32)             # (T, D)
    sin_t = np.asarray(sin[:T], dtype=np.float32)
    cos_rows = np.tile(cos_t, (B, 1))                         # (N, D), row n=b*T+t -> cos[t]
    sin_rows = np.tile(sin_t, (B, 1))
    scale = 1.0 / math.sqrt(D)                                # folded into the Q path
    cos_qkv = np.concatenate(
        [np.tile(cos_rows, (1, H)) * scale,                   # Q region (scaled)
         np.tile(cos_rows, (1, KV)),                          # K region
         np.ones((N, KV * D), np.float32)], axis=1)           # V region untouched
    sin_qkv = np.concatenate(
        [np.tile(sin_rows, (1, H)) * scale,
         np.tile(sin_rows, (1, KV)),
         np.zeros((N, KV * D), np.float32)], axis=1)

    def rot_block(d):
        m = np.zeros((d, d), np.float32)
        half = d // 2
        for i in range(half):
            m[i + half, i] = -1.0                             # first half gets -x2
            m[i, i + half] = 1.0                              # second half gets +x1
        return m

    rot = np.zeros((QKVW, QKVW), np.float32)                  # block-diag rotate-half
    for h in range(H):
        rot[h * D:(h + 1) * D, h * D:(h + 1) * D] = rot_block(D)
    for g in range(KV):
        o = E + g * D
        rot[o:o + D, o:o + D] = rot_block(D)

    n_idx = np.arange(N)
    rb, rt = n_idx // T, n_idx % T
    allowed = (rb[:, None] == rb[None, :]) & (rt[None, :] <= rt[:, None])
    bias = np.where(allowed, 0.0, -1e30).astype(np.float32)   # (N, N) batch-block causal
    bias = np.tile(bias, (GROUP, 1))                          # (GROUP*N, N) for stacked heads

    return {"cos": jnp.asarray(cos_qkv), "sin": jnp.asarray(sin_qkv),
            "rot": jnp.asarray(rot), "mask": jnp.asarray(bias)}


def compute_rope_params(head_dim, theta_base=THETA, context_length=CTX):
    inv_freq = 1.0 / (theta_base ** (jnp.arange(0, head_dim, 2, dtype=jnp.float32) / head_dim))
    positions = jnp.arange(context_length, dtype=jnp.float32)
    angles = positions[:, None] * inv_freq[None, :]
    angles = jnp.concatenate([angles, angles], axis=1)
    return jnp.cos(angles), jnp.sin(angles)


# ----------------------------- pure-JAX reference ----------------------------------
def ref_apply_rope(x, cos, sin):
    half = x.shape[-1] // 2
    x1, x2 = x[..., :half], x[..., half:]
    rot = jnp.concatenate([-x2, x1], axis=-1)
    return x * cos[None, None] + rot * sin[None, None]


def ref_block(x, cos, sin, p):
    def rms(t, w):
        return t * lax.rsqrt(jnp.mean(t * t, axis=-1, keepdims=True) + EPS) * w

    bsz, t, _ = x.shape
    shortcut = x
    xn = rms(x, p["n1"])
    q = (xn @ p["wq"].T).reshape(bsz, t, H, D).transpose(0, 2, 1, 3)
    k = (xn @ p["wk"].T).reshape(bsz, t, KV, D).transpose(0, 2, 1, 3)
    v = (xn @ p["wv"].T).reshape(bsz, t, KV, D).transpose(0, 2, 1, 3)
    q = ref_apply_rope(q, cos, sin)
    k = ref_apply_rope(k, cos, sin)
    k = jnp.repeat(k, GROUP, axis=1)
    v = jnp.repeat(v, GROUP, axis=1)
    s = jnp.einsum("bhtd,bhsd->bhts", q, k) / math.sqrt(D)
    causal = jnp.tril(jnp.ones((t, t), bool))
    s = jnp.where(causal[None, None], s, -jnp.inf)
    a = jax.nn.softmax(s, axis=-1)
    o = jnp.einsum("bhts,bhsd->bhtd", a, v).transpose(0, 2, 1, 3).reshape(bsz, t, E)
    x1 = o @ p["wo"].T + shortcut
    xn2 = rms(x1, p["n2"])
    ff = (jax.nn.silu(xn2 @ p["w1"].T) * (xn2 @ p["w2"].T)) @ p["w3"].T
    return x1 + ff


def ref_model(in_idx, cos, sin, layers, tok_emb, nf, wout):
    x = tok_emb[in_idx]                                       # (B, T, E)
    for p in layers:
        x = ref_block(x, cos[:T], sin[:T], p)
    x = x * lax.rsqrt(jnp.mean(x * x, axis=-1, keepdims=True) + EPS) * nf
    return x @ wout.T


# ------------------------------------ main ------------------------------------------
def init_layer_params(key):
    ks = jax.random.split(key, 9)
    return {
        "n1": 1.0 + 0.1 * jax.random.normal(ks[0], (E,), jnp.float32),
        "n2": 1.0 + 0.1 * jax.random.normal(ks[1], (E,), jnp.float32),
        "wq": 0.05 * jax.random.normal(ks[2], (E, E), jnp.float32),
        "wk": 0.05 * jax.random.normal(ks[3], (KV * D, E), jnp.float32),
        "wv": 0.05 * jax.random.normal(ks[4], (KV * D, E), jnp.float32),
        "wo": 0.05 * jax.random.normal(ks[5], (E, E), jnp.float32),
        "w1": 0.05 * jax.random.normal(ks[6], (HID, E), jnp.float32),
        "w2": 0.05 * jax.random.normal(ks[7], (HID, E), jnp.float32),
        "w3": 0.05 * jax.random.normal(ks[8], (E, HID), jnp.float32),
    }


if __name__ == "__main__":
    key = jax.random.PRNGKey(0)
    k_emb, k_idx, k_f, k_head, *k_layers = jax.random.split(key, 4 + LAYERS)

    tok_emb = jax.random.normal(k_emb, (VOCAB, E), jnp.float32)
    in_idx = jax.random.randint(k_idx, (B, T), 0, VOCAB)
    nf = 1.0 + 0.1 * jax.random.normal(k_f, (E,), jnp.float32)
    wout = 0.05 * jax.random.normal(k_head, (VOCAB, E), jnp.float32)
    layers_raw = [init_layer_params(k) for k in k_layers]

    cos, sin = compute_rope_params(D, THETA, CTX)

    # one-time packing (feedback: no per-call .T in the wrapper)
    prepared = [prepare_block_params(p) for p in layers_raw]
    consts = build_constants(cos, sin)
    nf_prepped = nf.reshape(1, E)
    wout_t = wout.T                                           # (E, VOCAB), lane-dense logits

    logits = llama3_forward_pallas(in_idx, tok_emb, prepared, consts, nf_prepped, wout_t)
    logits = jax.block_until_ready(logits)

    ref = ref_model(in_idx, cos, sin, layers_raw, tok_emb, nf, wout)
    assert logits.shape == (B, T, VOCAB)
    max_err = float(jnp.max(jnp.abs(logits - ref)))
    # tolerance loosened from 1e-4 because of pl.reciprocal(approx=True) in the softmax
    assert jnp.allclose(logits, ref, rtol=1e-2, atol=1e-2), f"max abs err {max_err}"

    print("KERNEL_OK")
</pallas_src>

<mosaic_0001>
module attributes {stable_mosaic.version = 11 : i64} {
  func.func @final_norm_head_kernel(%arg0: memref<16x64xf32, #tpu.memory_space<vmem>>, %arg1: memref<1x64xf32, #tpu.memory_space<vmem>>, %arg2: memref<64x256xf32, #tpu.memory_space<vmem>>, %arg3: memref<16x256xf32, #tpu.memory_space<vmem>>) attributes {dimension_semantics = [], scalar_prefetch = 0 : i64, scratch_operands = 0 : i64, tpu.core_type = #tpu.core_type<tc>} {
    %c0 = arith.constant 0 : index
    %c0_0 = arith.constant 0 : index
    %0 = vector.load %arg0[%c0, %c0_0] : memref<16x64xf32, #tpu.memory_space<vmem>>, vector<16x64xf32>
    %1 = arith.mulf %0, %0 : vector<16x64xf32>
    %cst = arith.constant dense<0.000000e+00> : vector<16xf32>
    %2 = vector.multi_reduction <add>, %1, %cst [1] : vector<16x64xf32> to vector<16xf32>
    %3 = vector.shape_cast %2 : vector<16xf32> to vector<16x1xf32>
    %cst_1 = arith.constant 6.400000e+01 : f32
    %4 = vector.broadcast %cst_1 : f32 to vector<16x1xf32>
    %5 = arith.divf %3, %4 : vector<16x1xf32>
    %cst_2 = arith.constant 9.99999974E-6 : f32
    %6 = vector.broadcast %cst_2 : f32 to vector<16x1xf32>
    %7 = arith.addf %5, %6 : vector<16x1xf32>
    %8 = math.rsqrt %7 : vector<16x1xf32>
    %9 = vector.broadcast %8 : vector<16x1xf32> to vector<16x64xf32>
    %10 = arith.mulf %0, %9 : vector<16x64xf32>
    %c0_3 = arith.constant 0 : index
    %c0_4 = arith.constant 0 : index
    %11 = vector.load %arg1[%c0_3, %c0_4] : memref<1x64xf32, #tpu.memory_space<vmem>>, vector<1x64xf32>
    %12 = vector.broadcast %11 : vector<1x64xf32> to vector<16x64xf32>
    %13 = arith.mulf %10, %12 : vector<16x64xf32>
    %c0_5 = arith.constant 0 : index
    %c0_6 = arith.constant 0 : index
    %14 = vector.load %arg2[%c0_5, %c0_6] : memref<64x256xf32, #tpu.memory_space<vmem>>, vector<64x256xf32>
    %cst_7 = arith.constant dense<0.000000e+00> : vector<16x256xf32>
    %15 = tpu.matmul %13, %14, %cst_7 {dimension_numbers = #tpu.dot_dimension_numbers<[1], [0], [0], [1], [0, 0, 1, 1], [], []>} : vector<16x64xf32>, vector<64x256xf32>, vector<16x256xf32> -> vector<16x256xf32>
    %c0_8 = arith.constant 0 : index
    %c0_9 = arith.constant 0 : index
    %16 = vector.load %arg3[%c0_8, %c0_9] : memref<16x256xf32, #tpu.memory_space<vmem>>, vector<16x256xf32>
    tpu.vector_store %arg3[%c0_8, %c0_9], %15 {strides = array<i32>} : memref<16x256xf32, #tpu.memory_space<vmem>>, vector<16x256xf32>,
    return
  }
}

module attributes {stable_mosaic.version = 11 : i64} {
  func.func @transformer_block_kernel(%arg0: memref<16x64xf32, #tpu.memory_space<vmem>>, %arg1: memref<16x128xf32, #tpu.memory_space<vmem>>, %arg2: memref<16x128xf32, #tpu.memory_space<vmem>>, %arg3: memref<128x128xf32, #tpu.memory_space<vmem>>, %arg4: memref<32x16xf32, #tpu.memory_space<vmem>>, %arg5: memref<1x64xf32, #tpu.memory_space<vmem>>, %arg6: memref<64x128xf32, #tpu.memory_space<vmem>>, %arg7: memref<64x64xf32, #tpu.memory_space<vmem>>, %arg8: memref<1x64xf32, #tpu.memory_space<vmem>>, %arg9: memref<64x256xf32, #tpu.memory_space<vmem>>, %arg10: memref<128x64xf32, #tpu.memory_space<vmem>>, %arg11: memref<16x64xf32, #tpu.memory_space<vmem>>) attributes {dimension_semantics = [], scalar_prefetch = 0 : i64, scratch_operands = 0 : i64, tpu.core_type = #tpu.core_type<tc>} {
    %c0 = arith.constant 0 : index
    %c0_0 = arith.constant 0 : index
    %0 = vector.load %arg0[%c0, %c0_0] : memref<16x64xf32, #tpu.memory_space<vmem>>, vector<16x64xf32>
    %1 = arith.mulf %0, %0 : vector<16x64xf32>
    %cst = arith.constant dense<0.000000e+00> : vector<16xf32>
    %2 = vector.multi_reduction <add>, %1, %cst [1] : vector<16x64xf32> to vector<16xf32>
    %3 = vector.shape_cast %2 : vector<16xf32> to vector<16x1xf32>
    %cst_1 = arith.constant 6.400000e+01 : f32
    %4 = vector.broadcast %cst_1 : f32 to vector<16x1xf32>
    %5 = arith.divf %3, %4 : vector<16x1xf32>
    %cst_2 = arith.constant 9.99999974E-6 : f32
    %6 = vector.broadcast %cst_2 : f32 to vector<16x1xf32>
    %7 = arith.addf %5, %6 : vector<16x1xf32>
    %8 = math.rsqrt %7 : vector<16x1xf32>
    %9 = vector.broadcast %8 : vector<16x1xf32> to vector<16x64xf32>
    %10 = arith.mulf %0, %9 : vector<16x64xf32>
    %c0_3 = arith.constant 0 : index
    %c0_4 = arith.constant 0 : index
    %11 = vector.load %arg5[%c0_3, %c0_4] : memref<1x64xf32, #tpu.memory_space<vmem>>, vector<1x64xf32>
    %12 = vector.broadcast %11 : vector<1x64xf32> to vector<16x64xf32>
    %13 = arith.mulf %10, %12 : vector<16x64xf32>
    %c0_5 = arith.constant 0 : index
    %c0_6 = arith.constant 0 : index
    %14 = vector.load %arg6[%c0_5, %c0_6] : memref<64x128xf32, #tpu.memory_space<vmem>>, vector<64x128xf32>
    %cst_7 = arith.constant dense<0.000000e+00> : vector<16x128xf32>
    %15 = tpu.matmul %13, %14, %cst_7 {dimension_numbers = #tpu.dot_dimension_numbers<[1], [0], [0], [1], [0, 0, 1, 1], [], []>} : vector<16x64xf32>, vector<64x128xf32>, vector<16x128xf32> -> vector<16x128xf32>
    %c0_8 = arith.constant 0 : index
    %c0_9 = arith.constant 0 : index
    %16 = vector.load %arg1[%c0_8, %c0_9] : memref<16x128xf32, #tpu.memory_space<vmem>>, vector<16x128xf32>
    %17 = arith.mulf %15, %16 : vector<16x128xf32>
    %c0_10 = arith.constant 0 : index
    %c0_11 = arith.constant 0 : index
    %18 = vector.load %arg3[%c0_10, %c0_11] : memref<128x128xf32, #tpu.memory_space<vmem>>, vector<128x128xf32>
    %cst_12 = arith.constant dense<0.000000e+00> : vector<16x128xf32>
    %19 = tpu.matmul %15, %18, %cst_12 {dimension_numbers = #tpu.dot_dimension_numbers<[1], [0], [0], [1], [0, 0, 1, 1], [], []>} : vector<16x128xf32>, vector<128x128xf32>, vector<16x128xf32> -> vector<16x128xf32>
    %c0_13 = arith.constant 0 : index
    %c0_14 = arith.constant 0 : index
    %20 = vector.load %arg2[%c0_13, %c0_14] : memref<16x128xf32, #tpu.memory_space<vmem>>, vector<16x128xf32>
    %21 = arith.mulf %19, %20 : vector<16x128xf32>
    %22 = arith.addf %17, %21 : vector<16x128xf32>
    %c0_15 = arith.constant 0 : index
    %c0_16 = arith.constant 0 : index
    %23 = vector.load %arg4[%c0_15, %c0_16] : memref<32x16xf32, #tpu.memory_space<vmem>>, vector<32x16xf32>
    %c0_17 = arith.constant 0 : index
    %c0_18 = arith.constant 0 : index
    %24 = vector.load %arg7[%c0_17, %c0_18] : memref<64x64xf32, #tpu.memory_space<vmem>>, vector<64x64xf32>
    %cst_19 = arith.constant 0.000000e+00 : f32
    %25 = vector.broadcast %cst_19 : f32 to vector<16x64xf32>
    %26 = vector.extract_strided_slice %22 {offsets = [0, 0], sizes = [16, 16], strides = [1, 1]} : vector<16x128xf32> to vector<16x16xf32>
    %27 = vector.extract_strided_slice %22 {offsets = [0, 16], sizes = [16, 16], strides = [1, 1]} : vector<16x128xf32> to vector<16x16xf32>
    %28 = tpu.concatenate %26, %27 in 0 : vector<16x16xf32>, vector<16x16xf32> -> vector<32x16xf32>
    %29 = vector.extract_strided_slice %22 {offsets = [0, 64], sizes = [16, 16], strides = [1, 1]} : vector<16x128xf32> to vector<16x16xf32>
    %30 = vector.extract_strided_slice %22 {offsets = [0, 96], sizes = [16, 16], strides = [1, 1]} : vector<16x128xf32> to vector<16x16xf32>
    %cst_20 = arith.constant dense<0.000000e+00> : vector<32x16xf32>
    %31 = tpu.matmul %28, %29, %cst_20 {dimension_numbers = #tpu.dot_dimension_numbers<[1], [1], [0], [0], [0, 0, 1, 0], [], []>} : vector<32x16xf32>, vector<16x16xf32>, vector<32x16xf32> -> vector<32x16xf32>
    %32 = arith.addf %31, %23 : vector<32x16xf32>
    %cst_21 = arith.constant dense<0xFF800000> : vector<32xf32>
    %33 = vector.multi_reduction <maximumf>, %32, %cst_21 [1] : vector<32x16xf32> to vector<32xf32>
    %34 = vector.shape_cast %33 : vector<32xf32> to vector<32x1xf32>
    %35 = vector.broadcast %34 : vector<32x1xf32> to vector<32x16xf32>
    %36 = arith.subf %32, %35 : vector<32x16xf32>
    %37 = math.exp %36 : vector<32x16xf32>
    %cst_22 = arith.constant dense<0.000000e+00> : vector<32xf32>
    %38 = vector.multi_reduction <add>, %37, %cst_22 [1] : vector<32x16xf32> to vector<32xf32>
    %39 = vector.shape_cast %38 : vector<32xf32> to vector<32x1xf32>
    %40 = tpu.reciprocal %39 {approx = true} : vector<32x1xf32> -> vector<32x1xf32>
    %41 = vector.broadcast %40 : vector<32x1xf32> to vector<32x16xf32>
    %42 = arith.mulf %37, %41 : vector<32x16xf32>
    %cst_23 = arith.constant dense<0.000000e+00> : vector<32x16xf32>
    %43 = tpu.matmul %42, %30, %cst_23 {dimension_numbers = #tpu.dot_dimension_numbers<[1], [0], [0], [1], [0, 0, 1, 1], [], []>} : vector<32x16xf32>, vector<16x16xf32>, vector<32x16xf32> -> vector<32x16xf32>
    %44 = vector.extract_strided_slice %43 {offsets = [0, 0], sizes = [16, 16], strides = [1, 1]} : vector<32x16xf32> to vector<16x16xf32>
    %45 = vector.extract_strided_slice %24 {offsets = [0, 0], sizes = [16, 64], strides = [1, 1]} : vector<64x64xf32> to vector<16x64xf32>
    %cst_24 = arith.constant dense<0.000000e+00> : vector<16x64xf32>
    %46 = tpu.matmul %44, %45, %cst_24 {dimension_numbers = #tpu.dot_dimension_numbers<[1], [0], [0], [1], [0, 0, 1, 1], [], []>} : vector<16x16xf32>, vector<16x64xf32>, vector<16x64xf32> -> vector<16x64xf32>
    %47 = arith.addf %25, %46 : vector<16x64xf32>
    %48 = vector.extract_strided_slice %43 {offsets = [16, 0], sizes = [16, 16], strides = [1, 1]} : vector<32x16xf32> to vector<16x16xf32>
    %49 = vector.extract_strided_slice %24 {offsets = [16, 0], sizes = [16, 64], strides = [1, 1]} : vector<64x64xf32> to vector<16x64xf32>
    %cst_25 = arith.constant dense<0.000000e+00> : vector<16x64xf32>
    %50 = tpu.matmul %48, %49, %cst_25 {dimension_numbers = #tpu.dot_dimension_numbers<[1], [0], [0], [1], [0, 0, 1, 1], [], []>} : vector<16x16xf32>, vector<16x64xf32>, vector<16x64xf32> -> vector<16x64xf32>
    %51 = arith.addf %47, %50 : vector<16x64xf32>
    %52 = vector.extract_strided_slice %22 {offsets = [0, 32], sizes = [16, 16], strides = [1, 1]} : vector<16x128xf32> to vector<16x16xf32>
    %53 = vector.extract_strided_slice %22 {offsets = [0, 48], sizes = [16, 16], strides = [1, 1]} : vector<16x128xf32> to vector<16x16xf32>
    %54 = tpu.concatenate %52, %53 in 0 : vector<16x16xf32>, vector<16x16xf32> -> vector<32x16xf32>
    %55 = vector.extract_strided_slice %22 {offsets = [0, 80], sizes = [16, 16], strides = [1, 1]} : vector<16x128xf32> to vector<16x16xf32>
    %56 = vector.extract_strided_slice %22 {offsets = [0, 112], sizes = [16, 16], strides = [1, 1]} : vector<16x128xf32> to vector<16x16xf32>
    %cst_26 = arith.constant dense<0.000000e+00> : vector<32x16xf32>
    %57 = tpu.matmul %54, %55, %cst_26 {dimension_numbers = #tpu.dot_dimension_numbers<[1], [1], [0], [0], [0, 0, 1, 0], [], []>} : vector<32x16xf32>, vector<16x16xf32>, vector<32x16xf32> -> vector<32x16xf32>
    %58 = arith.addf %57, %23 : vector<32x16xf32>
    %cst_27 = arith.constant dense<0xFF800000> : vector<32xf32>
    %59 = vector.multi_reduction <maximumf>, %58, %cst_27 [1] : vector<32x16xf32> to vector<32xf32>
    %60 = vector.shape_cast %59 : vector<32xf32> to vector<32x1xf32>
    %61 = vector.broadcast %60 : vector<32x1xf32> to vector<32x16xf32>
    %62 = arith.subf %58, %61 : vector<32x16xf32>
    %63 = math.exp %62 : vector<32x16xf32>
    %cst_28 = arith.constant dense<0.000000e+00> : vector<32xf32>
    %64 = vector.multi_reduction <add>, %63, %cst_28 [1] : vector<32x16xf32> to vector<32xf32>
    %65 = vector.shape_cast %64 : vector<32xf32> to vector<32x1xf32>
    %66 = tpu.reciprocal %65 {approx = true} : vector<32x1xf32> -> vector<32x1xf32>
    %67 = vector.broadcast %66 : vector<32x1xf32> to vector<32x16xf32>
    %68 = arith.mulf %63, %67 : vector<32x16xf32>
    %cst_29 = arith.constant dense<0.000000e+00> : vector<32x16xf32>
    %69 = tpu.matmul %68, %56, %cst_29 {dimension_numbers = #tpu.dot_dimension_numbers<[1], [0], [0], [1], [0, 0, 1, 1], [], []>} : vector<32x16xf32>, vector<16x16xf32>, vector<32x16xf32> -> vector<32x16xf32>
    %70 = vector.extract_strided_slice %69 {offsets = [0, 0], sizes = [16, 16], strides = [1, 1]} : vector<32x16xf32> to vector<16x16xf32>
    %71 = vector.extract_strided_slice %24 {offsets = [32, 0], sizes = [16, 64], strides = [1, 1]} : vector<64x64xf32> to vector<16x64xf32>
    %cst_30 = arith.constant dense<0.000000e+00> : vector<16x64xf32>
    %72 = tpu.matmul %70, %71, %cst_30 {dimension_numbers = #tpu.dot_dimension_numbers<[1], [0], [0], [1], [0, 0, 1, 1], [], []>} : vector<16x16xf32>, vector<16x64xf32>, vector<16x64xf32> -> vector<16x64xf32>
    %73 = arith.addf %51, %72 : vector<16x64xf32>
    %74 = vector.extract_strided_slice %69 {offsets = [16, 0], sizes = [16, 16], strides = [1, 1]} : vector<32x16xf32> to vector<16x16xf32>
    %75 = vector.extract_strided_slice %24 {offsets = [48, 0], sizes = [16, 64], strides = [1, 1]} : vector<64x64xf32> to vector<16x64xf32>
    %cst_31 = arith.constant dense<0.000000e+00> : vector<16x64xf32>
    %76 = tpu.matmul %74, %75, %cst_31 {dimension_numbers = #tpu.dot_dimension_numbers<[1], [0], [0], [1], [0, 0, 1, 1], [], []>} : vector<16x16xf32>, vector<16x64xf32>, vector<16x64xf32> -> vector<16x64xf32>
    %77 = arith.addf %73, %76 : vector<16x64xf32>
    %78 = arith.addf %0, %77 : vector<16x64xf32>
    %79 = arith.mulf %78, %78 : vector<16x64xf32>
    %cst_32 = arith.constant dense<0.000000e+00> : vector<16xf32>
    %80 = vector.multi_reduction <add>, %79, %cst_32 [1] : vector<16x64xf32> to vector<16xf32>
    %81 = vector.shape_cast %80 : vector<16xf32> to vector<16x1xf32>
    %cst_33 = arith.constant 6.400000e+01 : f32
    %82 = vector.broadcast %cst_33 : f32 to vector<16x1xf32>
    %83 = arith.divf %81, %82 : vector<16x1xf32>
    %cst_34 = arith.constant 9.99999974E-6 : f32
    %84 = vector.broadcast %cst_34 : f32 to vector<16x1xf32>
    %85 = arith.addf %83, %84 : vector<16x1xf32>
    %86 = math.rsqrt %85 : vector<16x1xf32>
    %87 = vector.broadcast %86 : vector<16x1xf32> to vector<16x64xf32>
    %88 = arith.mulf %78, %87 : vector<16x64xf32>
    %c0_35 = arith.constant 0 : index
    %c0_36 = arith.constant 0 : index
    %89 = vector.load %arg8[%c0_35, %c0_36] : memref<1x64xf32, #tpu.memory_space<vmem>>, vector<1x64xf32>
    %90 = vector.broadcast %89 : vector<1x64xf32> to vector<16x64xf32>
    %91 = arith.mulf %88, %90 : vector<16x64xf32>
    %c0_37 = arith.constant 0 : index
    %c0_38 = arith.constant 0 : index
    %92 = vector.load %arg9[%c0_37, %c0_38] : memref<64x256xf32, #tpu.memory_space<vmem>>, vector<64x256xf32>
    %cst_39 = arith.constant dense<0.000000e+00> : vector<16x256xf32>
    %93 = tpu.matmul %91, %92, %cst_39 {dimension_numbers = #tpu.dot_dimension_numbers<[1], [0], [0], [1], [0, 0, 1, 1], [], []>} : vector<16x64xf32>, vector<64x256xf32>, vector<16x256xf32> -> vector<16x256xf32>
    %94 = vector.extract_strided_slice %93 {offsets = [0, 0], sizes = [16, 128], strides = [1, 1]} : vector<16x256xf32> to vector<16x128xf32>
    %95 = vector.extract_strided_slice %93 {offsets = [0, 128], sizes = [16, 128], strides = [1, 1]} : vector<16x256xf32> to vector<16x128xf32>
    %96 = arith.negf %94 : vector<16x128xf32>
    %97 = math.exp %96 : vector<16x128xf32>
    %cst_40 = arith.constant 1.000000e+00 : f32
    %98 = vector.broadcast %cst_40 : f32 to vector<16x128xf32>
    %99 = arith.addf %98, %97 : vector<16x128xf32>
    %100 = arith.divf %98, %99 : vector<16x128xf32>
    %101 = arith.mulf %94, %100 : vector<16x128xf32>
    %102 = arith.mulf %101, %95 : vector<16x128xf32>
    %c0_41 = arith.constant 0 : index
    %c0_42 = arith.constant 0 : index
    %103 = vector.load %arg10[%c0_41, %c0_42] : memref<128x64xf32, #tpu.memory_space<vmem>>, vector<128x64xf32>
    %cst_43 = arith.constant dense<0.000000e+00> : vector<16x64xf32>
    %104 = tpu.matmul %102, %103, %cst_43 {dimension_numbers = #tpu.dot_dimension_numbers<[1], [0], [0], [1], [0, 0, 1, 1], [], []>} : vector<16x128xf32>, vector<128x64xf32>, vector<16x64xf32> -> vector<16x64xf32>
    %105 = arith.addf %78, %104 : vector<16x64xf32>
    %c0_44 = arith.constant 0 : index
    %c0_45 = arith.constant 0 : index
    %106 = vector.load %arg11[%c0_44, %c0_45] : memref<16x64xf32, #tpu.memory_space<vmem>>, vector<16x64xf32>
    tpu.vector_store %arg11[%c0_44, %c0_45], %105 {strides = array<i32>} : memref<16x64xf32, #tpu.memory_space<vmem>>, vector<16x64xf32>,
    return
  }
}

</mosaic_0001>

<llo_original>
// kernel: llama3_forward_pallas.5
$region0: #{llama3_forward_pallas.5}
  #allocation0 [shape = 'u32[]', space=smem, size = 0x4, offset = 0x4, fixed_abs, tag = 'smem constant byte address 0x4 - core index']
  #allocation1 [shape = 'u32[144,128]{1,0:T(1,128)}', space=vmem, size = 0x12000, scoped, tag = 'internal scratch']
  %s0 = inlined_call_operand.vmem [shape: f32[16,64], index: 0, kind: input, shape index: {}]
  %s1 = inlined_call_operand.vmem [shape: f32[1,64], index: 1, kind: input, shape index: {}]
  %s2 = inlined_call_operand.vmem [shape: f32[64,256], index: 2, kind: input, shape index: {}]
  %s3 = inlined_call_operand.hbm [shape: f32[16,256], index: 3, kind: output, shape index: {}]
  %s4 = sld [smem:[#allocation0]]
  $region22: #{llama3_forward_pallas.5} parent=0
    _
  %s6 = ssub.s32 1, %s4
  %s7 = scalar_select 0, %s6, %s4
  $region1: #{llama3_forward_pallas.5} parent=0
    #allocation2 [shape = 'u8[16384]{0}', space=vmem, size = 0x4000, scoped, tag = 'output window, operand 0, single buffered']
    #allocation3 [shape = 's32[1]{0}', space=sflag, size = 0x4, scoped, tag = 'scoped memory for llama3_forward_pallas.5']
    %8 = vsyncpa [#allocation3], 0
    // Predicated region
    $region2: #{llama3_forward_pallas.5} parent=1 // pred_check
      _
    $region3: #{llama3_forward_pallas.5} parent=1 // pred_check_branch
      %10 = sbr.rel (0) target = $region5
    $region4: #{llama3_forward_pallas.5} parent=1 // pred_region
      _
    $region5: #{llama3_forward_pallas.5} parent=1 // pred_fallthru
      _
    // Predicated region
    $region6: #{llama3_forward_pallas.5} parent=1 // pred_check
      _
    $region7: #{llama3_forward_pallas.5} parent=1 // pred_check_branch
      %12 = sbr.rel (0) target = $region9
    $region8: #{llama3_forward_pallas.5} parent=1 // pred_region
      _
    $region9: #{llama3_forward_pallas.5} parent=1 // pred_fallthru
      _
    // Predicated region
    $region10: #{llama3_forward_pallas.5} parent=1 // pred_check
      _
    $region11: #{llama3_forward_pallas.5} parent=1 // pred_check_branch
      %14 = sbr.rel (0) target = $region13
    $region12: #{llama3_forward_pallas.5} parent=1 // pred_region
      _
    $region13: #{llama3_forward_pallas.5} parent=1 // pred_fallthru
      _
    %v15 = vld [vmem:[%s0] sm:$0xff]
    %v16 = vld [vmem:[%s0 + $0x8] sm:$0xff]
    %v17 = vmul.f32 %v15, %v15
    %v18 = vmul.f32 %v16, %v16
    %vm19 = vcmask 523264
    %v20 = vsel %vm19, %v17, 0.0
    %21 = vadd.xlane.f32.xlu0 %v20
    %v22 = vpop.xlane.xlu0 %21
    %v23 = vsel %vm19, %v18, 0.0
    %24 = vadd.xlane.f32.xlu0 %v23
    %v25 = vpop.xlane.xlu0 %24
    %v26 = vrcp.pop 64.0
    %v27 = vmul.f32 %v22, %v26
    %v28 = vmul.f32 %v25, %v26
    %v29 = vadd.f32 %v27, 1e-05
    %v30 = vadd.f32 %v28, 1e-05
    %v31 = vrsqrt.pop %v29
    %v32 = vrsqrt.pop %v30
    %v33 = vmul.f32 %v15, %v31
    %v34 = vmul.f32 %v16, %v32
    %v35 = vld [vmem:[%s1] sm:$0x1]
    %v37 = vlaneseq
    %v38 = vshrl.u32 %v37, 7
    %v39 = vsub.s32 0, %v38
    %v40 = vrot.slane %v35, %v39
    %v42 = vmul.f32 %v33, %v40
    %v43 = vmul.f32 %v34, %v40
    %v44 = vld [vmem:[%s2] sm:$0xff]
    %v45 = vld [vmem:[%s2 + $0x8] sm:$0xff]
    %v46 = vld [vmem:[%s2 + $0x10] sm:$0xff]
    %v47 = vld [vmem:[%s2 + $0x18] sm:$0xff]
    %v48 = vld [vmem:[%s2 + $0x20] sm:$0xff]
    %v49 = vld [vmem:[%s2 + $0x28] sm:$0xff]
    %v50 = vld [vmem:[%s2 + $0x30] sm:$0xff]
    %v51 = vld [vmem:[%s2 + $0x38] sm:$0xff]
    %v52 = vld [vmem:[%s2 + $0x40] sm:$0xff]
    %v53 = vld [vmem:[%s2 + $0x48] sm:$0xff]
    %v54 = vld [vmem:[%s2 + $0x50] sm:$0xff]
    %v55 = vld [vmem:[%s2 + $0x58] sm:$0xff]
    %v56 = vld [vmem:[%s2 + $0x60] sm:$0xff]
    %v57 = vld [vmem:[%s2 + $0x68] sm:$0xff]
    %v58 = vld [vmem:[%s2 + $0x70] sm:$0xff]
    %v59 = vld [vmem:[%s2 + $0x78] sm:$0xff]
    %v61 = vsel %vm19, %v42, 0
    %v64 = vsel %vm19, %v43, 0
    %66 = vmatprep.subr.mxu0 0.0
    %67 = vmatpush1.msra.mxu0 0.0
    %68 = vmatprep.subr.mxu0 0.0
    %69 = vmatpush1.msra.mxu0 0.0
    %70 = vmatprep.subr.mxu0 0.0
    %71 = vmatpush1.msra.mxu0 0.0
    %72 = vmatprep.subr.mxu0 0.0
    %73 = vmatpush1.msra.mxu0 0.0
    %74 = vmatprep.subr.mxu0 0.0
    %75 = vmatpush1.msra.mxu0 0.0
    %76 = vmatprep.subr.mxu0 0.0
    %77 = vmatpush1.msra.mxu0 0.0
    %78 = vmatprep.subr.mxu0 0.0
    %79 = vmatpush1.msra.mxu0 0.0
    %80 = vmatprep.subr.mxu0 0.0
    %81 = vmatpush1.msra.mxu0 0.0
    %82 = vmatprep.subr.mxu0 %v59
    %83 = vmatpush1.msra.mxu0 %v58
    %84 = vmatprep.subr.mxu0 %v57
    %85 = vmatpush1.msra.mxu0 %v56
    %86 = vmatprep.subr.mxu0 %v55
    %87 = vmatpush1.msra.mxu0 %v54
    %88 = vmatprep.subr.mxu0 %v53
    %89 = vmatpush1.msra.mxu0 %v52
    %90 = vmatprep.subr.mxu0 %v51
    %91 = vmatpush1.msra.mxu0 %v50
    %92 = vmatprep.subr.mxu0 %v49
    %93 = vmatpush1.msra.mxu0 %v48
    %94 = vmatprep.subr.mxu0 %v47
    %95 = vmatpush1.msra.mxu0 %v46
    %96 = vmatprep.subr.mxu0 %v45
    %97 = vmatpush1.msra.mxu0 %v44
    %98 = vmatprep.subr.mxu0 0.0
    %99 = vmatpush2.msra.mxu0 0.0
    %100 = vmatprep.subr.mxu0 0.0
    %101 = vmatpush2.msra.mxu0 0.0
    %102 = vmatprep.subr.mxu0 0.0
    %103 = vmatpush2.msra.mxu0 0.0
    %104 = vmatprep.subr.mxu0 0.0
    %105 = vmatpush2.msra.mxu0 0.0
    %106 = vmatprep.subr.mxu0 0.0
    %107 = vmatpush2.msra.mxu0 0.0
    %108 = vmatprep.subr.mxu0 0.0
    %109 = vmatpush2.msra.mxu0 0.0
    %110 = vmatprep.subr.mxu0 0.0
    %111 = vmatpush2.msra.mxu0 0.0
    %112 = vmatprep.subr.mxu0 0.0
    %113 = vmatpush2.msra.mxu0 0.0
    %114 = vmatprep.subr.mxu0 0.0
    %115 = vmatpush2.msra.mxu0 0.0
    %116 = vmatprep.subr.mxu0 0.0
    %117 = vmatpush2.msra.mxu0 0.0
    %118 = vmatprep.subr.mxu0 0.0
    %119 = vmatpush2.msra.mxu0 0.0
    %120 = vmatprep.subr.mxu0 0.0
    %121 = vmatpush2.msra.mxu0 0.0
    %122 = vmatprep.subr.mxu0 0.0
    %123 = vmatpush2.msra.mxu0 0.0
    %124 = vmatprep.subr.mxu0 0.0
    %125 = vmatpush2.msra.mxu0 0.0
    %126 = vmatprep.subr.mxu0 0.0
    %127 = vmatpush2.msra.mxu0 0.0
    %128 = vmatprep.subr.mxu0 0.0
    %129 = vmatpush2.msra.mxu0 0.0
    %130 = vmatprep.mubr.f32.mxu0 0.0
    %131 = vmatmul.mubr.f32.gmra.mxu0 %v61
    %v132 = vpop.f32.mrf.mxu0
    %v133 = vadd.f32 0.0, %v132
    %v134 = vpop.f32.mrf.mxu0
    %v135 = vadd.f32 0.0, %v134
    %136 = vmatprep.mubr.f32.mxu0 0.0
    %137 = vmatmul.mubr.f32.gmra.mxu0 %v64
    %v138 = vpop.f32.mrf.mxu0
    %v139 = vadd.f32 0.0, %v138
    %v140 = vpop.f32.mrf.mxu0
    %v141 = vadd.f32 0.0, %v140
    %142 = vdwg.mxu0
    %143 = vst [vmem:[#allocation2] sm:$0xff] %v133
    %144 = vst [vmem:[#allocation2 + $0x8] sm:$0xff] %v135
    %145 = vst [vmem:[#allocation2 + $0x10] sm:$0xff] %v139
    %146 = vst [vmem:[#allocation2 + $0x18] sm:$0xff] %v141
    // Predicated region
    $region14: #{llama3_forward_pallas.5} parent=1 // pred_check
      _
    $region15: #{llama3_forward_pallas.5} parent=1 // pred_check_branch
      %148 = sbr.rel (0) target = $region17
    $region16: #{llama3_forward_pallas.5} parent=1 // pred_region
      %s150 = ssub.s32 512, 512
      %151 = vsyncadd [#allocation3], %s150
      %s152 = sshll.u32 [#allocation2], 4
      %s153 = int_to_ptr.vmem [resolvable:$true] %s152
      %158 = dma.vmem_to_hbm [thread:$0]  %s153, 512, %s3, [#allocation3], 256, 256, 16
    $region17: #{llama3_forward_pallas.5} parent=1 // pred_fallthru
      _
    // Predicated region
    $region18: #{llama3_forward_pallas.5} parent=1 // pred_check
      _
    $region19: #{llama3_forward_pallas.5} parent=1 // pred_check_branch
      %160 = sbr.rel (0) target = $region21
    $region20: #{llama3_forward_pallas.5} parent=1 // pred_region
      %161 = dma.done [#allocation3], 512
    $region21: #{llama3_forward_pallas.5} parent=1 // pred_fallthru
      _
    %162 = vsyncpa [#allocation3], 1

// kernel: llama3_forward_pallas.3
$region0: #{llama3_forward_pallas.3}
  #allocation0 [shape = 'u32[]', space=smem, size = 0x4, offset = 0x4, fixed_abs, tag = 'smem constant byte address 0x4 - core index']
  #allocation1 [shape = 'u32[144,128]{1,0:T(1,128)}', space=vmem, size = 0x12000, scoped, tag = 'internal scratch']
  %s0 = inlined_call_operand.vmem [shape: f32[16,64], index: 0, kind: input, shape index: {}]
  %s1 = inlined_call_operand.vmem [shape: f32[16,128], index: 1, kind: input, shape index: {}]
  %s2 = inlined_call_operand.vmem [shape: f32[16,128], index: 2, kind: input, shape index: {}]
  %s3 = inlined_call_operand.vmem [shape: f32[128,128], index: 3, kind: input, shape index: {}]
  %s4 = inlined_call_operand.vmem [shape: f32[32,16], index: 4, kind: input, shape index: {}]
  %s5 = inlined_call_operand.vmem [shape: f32[1,64], index: 5, kind: input, shape index: {}]
  %s6 = inlined_call_operand.vmem [shape: f32[64,128], index: 6, kind: input, shape index: {}]
  %s7 = inlined_call_operand.vmem [shape: f32[64,64], index: 7, kind: input, shape index: {}]
  %s8 = inlined_call_operand.vmem [shape: f32[1,64], index: 8, kind: input, shape index: {}]
  %s9 = inlined_call_operand.vmem [shape: f32[64,256], index: 9, kind: input, shape index: {}]
  %s10 = inlined_call_operand.vmem [shape: f32[128,64], index: 10, kind: input, shape index: {}]
  %s11 = inlined_call_operand.vmem [shape: f32[16,64], index: 11, kind: output, shape index: {}]
  %s12 = sld [smem:[#allocation0]]
  $region54: #{llama3_forward_pallas.3} parent=0
    _
  %s14 = ssub.s32 1, %s12
  %s15 = scalar_select 0, %s14, %s12
  // Predicated region
  $region2: #{llama3_forward_pallas.3} parent=0 // pred_check
    _
  $region3: #{llama3_forward_pallas.3} parent=0 // pred_check_branch
    %17 = sbr.rel (0) target = $region5
  $region4: #{llama3_forward_pallas.3} parent=0 // pred_region
    _
  $region5: #{llama3_forward_pallas.3} parent=0 // pred_fallthru
    _
  // Predicated region
  $region6: #{llama3_forward_pallas.3} parent=0 // pred_check
    _
  $region7: #{llama3_forward_pallas.3} parent=0 // pred_check_branch
    %19 = sbr.rel (0) target = $region9
  $region8: #{llama3_forward_pallas.3} parent=0 // pred_region
    _
  $region9: #{llama3_forward_pallas.3} parent=0 // pred_fallthru
    _
  // Predicated region
  $region10: #{llama3_forward_pallas.3} parent=0 // pred_check
    _
  $region11: #{llama3_forward_pallas.3} parent=0 // pred_check_branch
    %21 = sbr.rel (0) target = $region13
  $region12: #{llama3_forward_pallas.3} parent=0 // pred_region
    _
  $region13: #{llama3_forward_pallas.3} parent=0 // pred_fallthru
    _
  // Predicated region
  $region14: #{llama3_forward_pallas.3} parent=0 // pred_check
    _
  $region15: #{llama3_forward_pallas.3} parent=0 // pred_check_branch
    %23 = sbr.rel (0) target = $region17
  $region16: #{llama3_forward_pallas.3} parent=0 // pred_region
    _
  $region17: #{llama3_forward_pallas.3} parent=0 // pred_fallthru
    _
  // Predicated region
  $region18: #{llama3_forward_pallas.3} parent=0 // pred_check
    _
  $region19: #{llama3_forward_pallas.3} parent=0 // pred_check_branch
    %25 = sbr.rel (0) target = $region21
  $region20: #{llama3_forward_pallas.3} parent=0 // pred_region
    _
  $region21: #{llama3_forward_pallas.3} parent=0 // pred_fallthru
    _
  // Predicated region
  $region22: #{llama3_forward_pallas.3} parent=0 // pred_check
    _
  $region23: #{llama3_forward_pallas.3} parent=0 // pred_check_branch
    %27 = sbr.rel (0) target = $region25
  $region24: #{llama3_forward_pallas.3} parent=0 // pred_region
    _
  $region25: #{llama3_forward_pallas.3} parent=0 // pred_fallthru
    _
  // Predicated region
  $region26: #{llama3_forward_pallas.3} parent=0 // pred_check
    _
  $region27: #{llama3_forward_pallas.3} parent=0 // pred_check_branch
    %29 = sbr.rel (0) target = $region29
  $region28: #{llama3_forward_pallas.3} parent=0 // pred_region
    _
  $region29: #{llama3_forward_pallas.3} parent=0 // pred_fallthru
    _
  // Predicated region
  $region30: #{llama3_forward_pallas.3} parent=0 // pred_check
    _
  $region31: #{llama3_forward_pallas.3} parent=0 // pred_check_branch
    %31 = sbr.rel (0) target = $region33
  $region32: #{llama3_forward_pallas.3} parent=0 // pred_region
    _
  $region33: #{llama3_forward_pallas.3} parent=0 // pred_fallthru
    _
  // Predicated region
  $region34: #{llama3_forward_pallas.3} parent=0 // pred_check
    _
  $region35: #{llama3_forward_pallas.3} parent=0 // pred_check_branch
    %33 = sbr.rel (0) target = $region37
  $region36: #{llama3_forward_pallas.3} parent=0 // pred_region
    _
  $region37: #{llama3_forward_pallas.3} parent=0 // pred_fallthru
    _
  // Predicated region
  $region38: #{llama3_forward_pallas.3} parent=0 // pred_check
    _
  $region39: #{llama3_forward_pallas.3} parent=0 // pred_check_branch
    %35 = sbr.rel (0) target = $region41
  $region40: #{llama3_forward_pallas.3} parent=0 // pred_region
    _
  $region41: #{llama3_forward_pallas.3} parent=0 // pred_fallthru
    _
  // Predicated region
  $region42: #{llama3_forward_pallas.3} parent=0 // pred_check
    _
  $region43: #{llama3_forward_pallas.3} parent=0 // pred_check_branch
    %37 = sbr.rel (0) target = $region45
  $region44: #{llama3_forward_pallas.3} parent=0 // pred_region
    _
  $region45: #{llama3_forward_pallas.3} parent=0 // pred_fallthru
    _
  %v38 = vld [vmem:[%s0] sm:$0xff]
  %v39 = vld [vmem:[%s0 + $0x8] sm:$0xff]
  %v40 = vmul.f32 %v38, %v38
  %v41 = vmul.f32 %v39, %v39
  %vm42 = vcmask 523264
  %v43 = vsel %vm42, %v40, 0.0
  %44 = vadd.xlane.f32.xlu0 %v43
  %v45 = vpop.xlane.xlu0 %44
  %v46 = vsel %vm42, %v41, 0.0
  %47 = vadd.xlane.f32.xlu0 %v46
  %v48 = vpop.xlane.xlu0 %47
  %v49 = vrcp.pop 64.0
  %v50 = vmul.f32 %v45, %v49
  %v51 = vmul.f32 %v48, %v49
  %v52 = vadd.f32 %v50, 1e-05
  %v53 = vadd.f32 %v51, 1e-05
  %v54 = vrsqrt.pop %v52
  %v55 = vrsqrt.pop %v53
  %v56 = vmul.f32 %v38, %v54
  %v57 = vmul.f32 %v39, %v55
  %v58 = vld [vmem:[%s5] sm:$0x1]
  %v60 = vlaneseq
  %v61 = vshrl.u32 %v60, 7
  %v62 = vsub.s32 0, %v61
  %v63 = vrot.slane %v58, %v62
  %v65 = vmul.f32 %v56, %v63
  %v66 = vmul.f32 %v57, %v63
  %v67 = vld [vmem:[%s6] sm:$0xff]
  %v68 = vld [vmem:[%s6 + $0x8] sm:$0xff]
  %v69 = vld [vmem:[%s6 + $0x10] sm:$0xff]
  %v70 = vld [vmem:[%s6 + $0x18] sm:$0xff]
  %v71 = vld [vmem:[%s6 + $0x20] sm:$0xff]
  %v72 = vld [vmem:[%s6 + $0x28] sm:$0xff]
  %v73 = vld [vmem:[%s6 + $0x30] sm:$0xff]
  %v74 = vld [vmem:[%s6 + $0x38] sm:$0xff]
  %v76 = vsel %vm42, %v65, 0
  %v79 = vsel %vm42, %v66, 0
  %81 = vmatprep.subr.mxu0 0.0
  %82 = vmatpush1.msra.mxu0 0.0
  %83 = vmatprep.subr.mxu0 0.0
  %84 = vmatpush1.msra.mxu0 0.0
  %85 = vmatprep.subr.mxu0 0.0
  %86 = vmatpush1.msra.mxu0 0.0
  %87 = vmatprep.subr.mxu0 0.0
  %88 = vmatpush1.msra.mxu0 0.0
  %89 = vmatprep.subr.mxu0 0.0
  %90 = vmatpush1.msra.mxu0 0.0
  %91 = vmatprep.subr.mxu0 0.0
  %92 = vmatpush1.msra.mxu0 0.0
  %93 = vmatprep.subr.mxu0 0.0
  %94 = vmatpush1.msra.mxu0 0.0
  %95 = vmatprep.subr.mxu0 0.0
  %96 = vmatpush1.msra.mxu0 0.0
  %97 = vmatprep.subr.mxu0 0.0
  %98 = vmatpush1.msra.mxu0 %v74
  %99 = vmatprep.subr.mxu0 0.0
  %100 = vmatpush1.msra.mxu0 %v73
  %101 = vmatprep.subr.mxu0 0.0
  %102 = vmatpush1.msra.mxu0 %v72
  %103 = vmatprep.subr.mxu0 0.0
  %104 = vmatpush1.msra.mxu0 %v71
  %105 = vmatprep.subr.mxu0 0.0
  %106 = vmatpush1.msra.mxu0 %v70
  %107 = vmatprep.subr.mxu0 0.0
  %108 = vmatpush1.msra.mxu0 %v69
  %109 = vmatprep.subr.mxu0 0.0
  %110 = vmatpush1.msra.mxu0 %v68
  %111 = vmatprep.subr.mxu0 0.0
  %112 = vmatpush1.msra.mxu0 %v67
  %113 = vmatprep.subr.mxu0 0.0
  %114 = vmatpush2.msra.mxu0 0.0
  %115 = vmatprep.subr.mxu0 0.0
  %116 = vmatpush2.msra.mxu0 0.0
  %117 = vmatprep.subr.mxu0 0.0
  %118 = vmatpush2.msra.mxu0 0.0
  %119 = vmatprep.subr.mxu0 0.0
  %120 = vmatpush2.msra.mxu0 0.0
  %121 = vmatprep.subr.mxu0 0.0
  %122 = vmatpush2.msra.mxu0 0.0
  %123 = vmatprep.subr.mxu0 0.0
  %124 = vmatpush2.msra.mxu0 0.0
  %125 = vmatprep.subr.mxu0 0.0
  %126 = vmatpush2.msra.mxu0 0.0
  %127 = vmatprep.subr.mxu0 0.0
  %128 = vmatpush2.msra.mxu0 0.0
  %129 = vmatprep.subr.mxu0 0.0
  %130 = vmatpush2.msra.mxu0 0.0
  %131 = vmatprep.subr.mxu0 0.0
  %132 = vmatpush2.msra.mxu0 0.0
  %133 = vmatprep.subr.mxu0 0.0
  %134 = vmatpush2.msra.mxu0 0.0
  %135 = vmatprep.subr.mxu0 0.0
  %136 = vmatpush2.msra.mxu0 0.0
  %137 = vmatprep.subr.mxu0 0.0
  %138 = vmatpush2.msra.mxu0 0.0
  %139 = vmatprep.subr.mxu0 0.0
  %140 = vmatpush2.msra.mxu0 0.0
  %141 = vmatprep.subr.mxu0 0.0
  %142 = vmatpush2.msra.mxu0 0.0
  %143 = vmatprep.subr.mxu0 0.0
  %144 = vmatpush2.msra.mxu0 0.0
  %145 = vmatprep.mubr.f32.mxu0 0.0
  %146 = vmatmul.mubr.f32.gmra.mxu0 %v76
  %v147 = vpop.f32.mrf.mxu0
  %v148 = vadd.f32 0.0, %v147
  %v149 = vpop.f32.mrf.mxu0
  %150 = vmatprep.mubr.f32.mxu0 0.0
  %151 = vmatmul.mubr.f32.gmra.mxu0 %v79
  %v152 = vpop.f32.mrf.mxu0
  %v153 = vadd.f32 0.0, %v152
  %v154 = vpop.f32.mrf.mxu0
  %155 = vdwg.mxu0
  %v156 = vld [vmem:[%s1] sm:$0xff]
  %v157 = vld [vmem:[%s1 + $0x8] sm:$0xff]
  %v158 = vmul.f32 %v148, %v156
  %v159 = vmul.f32 %v153, %v157
  %v160 = vld [vmem:[%s3] sm:$0xff]
  %v161 = vld [vmem:[%s3 + $0x8] sm:$0xff]
  %v162 = vld [vmem:[%s3 + $0x10] sm:$0xff]
  %v163 = vld [vmem:[%s3 + $0x18] sm:$0xff]
  %v164 = vld [vmem:[%s3 + $0x20] sm:$0xff]
  %v165 = vld [vmem:[%s3 + $0x28] sm:$0xff]
  %v166 = vld [vmem:[%s3 + $0x30] sm:$0xff]
  %v167 = vld [vmem:[%s3 + $0x38] sm:$0xff]
  %v168 = vld [vmem:[%s3 + $0x40] sm:$0xff]
  %v169 = vld [vmem:[%s3 + $0x48] sm:$0xff]
  %v170 = vld [vmem:[%s3 + $0x50] sm:$0xff]
  %v171 = vld [vmem:[%s3 + $0x58] sm:$0xff]
  %v172 = vld [vmem:[%s3 + $0x60] sm:$0xff]
  %v173 = vld [vmem:[%s3 + $0x68] sm:$0xff]
  %v174 = vld [vmem:[%s3 + $0x70] sm:$0xff]
  %v175 = vld [vmem:[%s3 + $0x78] sm:$0xff]
  %176 = vmatprep.subr.mxu0 0.0
  %177 = vmatpush1.msra.mxu0 %v175
  %178 = vmatprep.subr.mxu0 0.0
  %179 = vmatpush1.msra.mxu0 %v174
  %180 = vmatprep.subr.mxu0 0.0
  %181 = vmatpush1.msra.mxu0 %v173
  %182 = vmatprep.subr.mxu0 0.0
  %183 = vmatpush1.msra.mxu0 %v172
  %184 = vmatprep.subr.mxu0 0.0
  %185 = vmatpush1.msra.mxu0 %v171
  %186 = vmatprep.subr.mxu0 0.0
  %187 = vmatpush1.msra.mxu0 %v170
  %188 = vmatprep.subr.mxu0 0.0
  %189 = vmatpush1.msra.mxu0 %v169
  %190 = vmatprep.subr.mxu0 0.0
  %191 = vmatpush1.msra.mxu0 %v168
  %192 = vmatprep.subr.mxu0 0.0
  %193 = vmatpush1.msra.mxu0 %v167
  %194 = vmatprep.subr.mxu0 0.0
  %195 = vmatpush1.msra.mxu0 %v166
  %196 = vmatprep.subr.mxu0 0.0
  %197 = vmatpush1.msra.mxu0 %v165
  %198 = vmatprep.subr.mxu0 0.0
  %199 = vmatpush1.msra.mxu0 %v164
  %200 = vmatprep.subr.mxu0 0.0
  %201 = vmatpush1.msra.mxu0 %v163
  %202 = vmatprep.subr.mxu0 0.0
  %203 = vmatpush1.msra.mxu0 %v162
  %204 = vmatprep.subr.mxu0 0.0
  %205 = vmatpush1.msra.mxu0 %v161
  %206 = vmatprep.subr.mxu0 0.0
  %207 = vmatpush1.msra.mxu0 %v160
  %208 = vmatprep.subr.mxu0 0.0
  %209 = vmatpush2.msra.mxu0 0.0
  %210 = vmatprep.subr.mxu0 0.0
  %211 = vmatpush2.msra.mxu0 0.0
  %212 = vmatprep.subr.mxu0 0.0
  %213 = vmatpush2.msra.mxu0 0.0
  %214 = vmatprep.subr.mxu0 0.0
  %215 = vmatpush2.msra.mxu0 0.0
  %216 = vmatprep.subr.mxu0 0.0
  %217 = vmatpush2.msra.mxu0 0.0
  %218 = vmatprep.subr.mxu0 0.0
  %219 = vmatpush2.msra.mxu0 0.0
  %220 = vmatprep.subr.mxu0 0.0
  %221 = vmatpush2.msra.mxu0 0.0
  %222 = vmatprep.subr.mxu0 0.0
  %223 = vmatpush2.msra.mxu0 0.0
  %224 = vmatprep.subr.mxu0 0.0
  %225 = vmatpush2.msra.mxu0 0.0
  %226 = vmatprep.subr.mxu0 0.0
  %227 = vmatpush2.msra.mxu0 0.0
  %228 = vmatprep.subr.mxu0 0.0
  %229 = vmatpush2.msra.mxu0 0.0
  %230 = vmatprep.subr.mxu0 0.0
  %231 = vmatpush2.msra.mxu0 0.0
  %232 = vmatprep.subr.mxu0 0.0
  %233 = vmatpush2.msra.mxu0 0.0
  %234 = vmatprep.subr.mxu0 0.0
  %235 = vmatpush2.msra.mxu0 0.0
  %236 = vmatprep.subr.mxu0 0.0
  %237 = vmatpush2.msra.mxu0 0.0
  %238 = vmatprep.subr.mxu0 0.0
  %239 = vmatpush2.msra.mxu0 0.0
  %240 = vmatprep.mubr.f32.mxu0 0.0
  %241 = vmatmul.mubr.f32.gmra.mxu0 %v148
  %v242 = vpop.f32.mrf.mxu0
  %v243 = vadd.f32 0.0, %v242
  %v244 = vpop.f32.mrf.mxu0
  %245 = vmatprep.mubr.f32.mxu0 0.0
  %246 = vmatmul.mubr.f32.gmra.mxu0 %v153
  %v247 = vpop.f32.mrf.mxu0
  %v248 = vadd.f32 0.0, %v247
  %v249 = vpop.f32.mrf.mxu0
  %250 = vdwg.mxu0
  %v251 = vld [vmem:[%s2] sm:$0xff]
  %v252 = vld [vmem:[%s2 + $0x8] sm:$0xff]
  %v253 = vmul.f32 %v243, %v251
  %v254 = vmul.f32 %v248, %v252
  %v255 = vadd.f32 %v158, %v253
  %v256 = vadd.f32 %v159, %v254
  %v257 = vld [vmem:[%s4] sm:$0xff]
  %v258 = vld [vmem:[%s4 + $0x8] sm:$0xff]
  %v259 = vld [vmem:[%s4 + $0x10] sm:$0xff]
  %v260 = vld [vmem:[%s4 + $0x18] sm:$0xff]
  %v261 = vld [vmem:[%s7] sm:$0xff]
  %v262 = vld [vmem:[%s7 + $0x8] sm:$0xff]
  %v263 = vld [vmem:[%s7 + $0x10] sm:$0xff]
  %v264 = vld [vmem:[%s7 + $0x18] sm:$0xff]
  %v265 = vld [vmem:[%s7 + $0x20] sm:$0xff]
  %v266 = vld [vmem:[%s7 + $0x28] sm:$0xff]
  %v267 = vld [vmem:[%s7 + $0x30] sm:$0xff]
  %v268 = vld [vmem:[%s7 + $0x38] sm:$0xff]
  %271 = vrot.lane.b32.xlu0 %v255, 112
  %v272 = vpop.permute.xlu0 %271
  %273 = vrot.lane.b32.xlu0 %v256, 112
  %v274 = vpop.permute.xlu0 %273
  %275 = vrot.lane.b32.xlu0 %v255, 64
  %v276 = vpop.permute.xlu0 %275
  %277 = vrot.lane.b32.xlu0 %v256, 64
  %v278 = vpop.permute.xlu0 %277
  %vm279 = vcmask 130048
  %v280 = vsel %vm279, %v255, 0
  %v282 = vsel %vm279, %v256, 0
  %v284 = vsel %vm279, %v272, 0
  %v286 = vsel %vm279, %v274, 0
  %v288 = vsel %vm279, %v276, 0
  %v290 = vsel %vm279, %v278, 0
  %292 = vmatprep.subr.mxu0 0.0
  %293 = vmatpush1.xpose.msra.mxu0 0.0
  %294 = vmatprep.subr.mxu0 0.0
  %295 = vmatpush1.xpose.msra.mxu0 0.0
  %296 = vmatprep.subr.mxu0 0.0
  %297 = vmatpush1.xpose.msra.mxu0 0.0
  %298 = vmatprep.subr.mxu0 0.0
  %299 = vmatpush1.xpose.msra.mxu0 0.0
  %300 = vmatprep.subr.mxu0 0.0
  %301 = vmatpush1.xpose.msra.mxu0 0.0
  %302 = vmatprep.subr.mxu0 0.0
  %303 = vmatpush1.xpose.msra.mxu0 0.0
  %304 = vmatprep.subr.mxu0 0.0
  %305 = vmatpush1.xpose.msra.mxu0 0.0
  %306 = vmatprep.subr.mxu0 0.0
  %307 = vmatpush1.xpose.msra.mxu0 0.0
  %308 = vmatprep.subr.mxu0 0.0
  %309 = vmatpush1.xpose.msra.mxu0 0.0
  %310 = vmatprep.subr.mxu0 0.0
  %311 = vmatpush1.xpose.msra.mxu0 0.0
  %312 = vmatprep.subr.mxu0 0.0
  %313 = vmatpush1.xpose.msra.mxu0 0.0
  %314 = vmatprep.subr.mxu0 0.0
  %315 = vmatpush1.xpose.msra.mxu0 0.0
  %316 = vmatprep.subr.mxu0 0.0
  %317 = vmatpush1.xpose.msra.mxu0 0.0
  %318 = vmatprep.subr.mxu0 0.0
  %319 = vmatpush1.xpose.msra.mxu0 0.0
  %320 = vmatprep.subr.mxu0 0.0
  %321 = vmatpush1.xpose.msra.mxu0 %v290
  %322 = vmatprep.subr.mxu0 0.0
  %323 = vmatpush1.xpose.msra.mxu0 %v288
  %324 = vmatprep.subr.mxu0 0.0
  %325 = vmatpush2.xpose.msra.mxu0 0.0
  %326 = vmatprep.subr.mxu0 0.0
  %327 = vmatpush2.xpose.msra.mxu0 0.0
  %328 = vmatprep.subr.mxu0 0.0
  %329 = vmatpush2.xpose.msra.mxu0 0.0
  %330 = vmatprep.subr.mxu0 0.0
  %331 = vmatpush2.xpose.msra.mxu0 0.0
  %332 = vmatprep.subr.mxu0 0.0
  %333 = vmatpush2.xpose.msra.mxu0 0.0
  %334 = vmatprep.subr.mxu0 0.0
  %335 = vmatpush2.xpose.msra.mxu0 0.0
  %336 = vmatprep.subr.mxu0 0.0
  %337 = vmatpush2.xpose.msra.mxu0 0.0
  %338 = vmatprep.subr.mxu0 0.0
  %339 = vmatpush2.xpose.msra.mxu0 0.0
  %340 = vmatprep.subr.mxu0 0.0
  %341 = vmatpush2.xpose.msra.mxu0 0.0
  %342 = vmatprep.subr.mxu0 0.0
  %343 = vmatpush2.xpose.msra.mxu0 0.0
  %344 = vmatprep.subr.mxu0 0.0
  %345 = vmatpush2.xpose.msra.mxu0 0.0
  %346 = vmatprep.subr.mxu0 0.0
  %347 = vmatpush2.xpose.msra.mxu0 0.0
  %348 = vmatprep.subr.mxu0 0.0
  %349 = vmatpush2.xpose.msra.mxu0 0.0
  %350 = vmatprep.subr.mxu0 0.0
  %351 = vmatpush2.xpose.msra.mxu0 0.0
  %352 = vmatprep.subr.mxu0 0.0
  %353 = vmatpush2.xpose.msra.mxu0 0.0
  %354 = vmatprep.subr.mxu0 0.0
  %355 = vmatpush2.xpose.msra.mxu0 0.0
  %356 = vmatprep.mubr.f32.mxu0 0.0
  %357 = vmatmul.mubr.f32.gmra.mxu0 %v280
  %v358 = vpop.f32.mrf.mxu0
  %v359 = vadd.f32 %v257, %v358
  %v360 = vpop.f32.mrf.mxu0
  %361 = vmatprep.mubr.f32.mxu0 0.0
  %362 = vmatmul.mubr.f32.gmra.mxu0 %v282
  %v363 = vpop.f32.mrf.mxu0
  %v364 = vadd.f32 %v258, %v363
  %v365 = vpop.f32.mrf.mxu0
  %366 = vmatprep.mubr.f32.mxu0 0.0
  %367 = vmatmul.mubr.f32.gmra.mxu0 %v284
  %v368 = vpop.f32.mrf.mxu0
  %v369 = vadd.f32 %v259, %v368
  %v370 = vpop.f32.mrf.mxu0
  %371 = vmatprep.mubr.f32.mxu0 0.0
  %372 = vmatmul.mubr.f32.gmra.mxu0 %v286
  %v373 = vpop.f32.mrf.mxu0
  %v374 = vadd.f32 %v260, %v373
  %v375 = vpop.f32.mrf.mxu0
  %376 = vdwg.mxu0
  %v377 = vsel %vm279, %v359, -inf
  %378 = vmax.xlane.f32.xlu0 %v377
  %v379 = vpop.xlane.xlu0 %378
  %v380 = vsel %vm279, %v364, -inf
  %381 = vmax.xlane.f32.xlu0 %v380
  %v382 = vpop.xlane.xlu0 %381
  %v383 = vsel %vm279, %v369, -inf
  %384 = vmax.xlane.f32.xlu0 %v383
  %v385 = vpop.xlane.xlu0 %384
  %v386 = vsel %vm279, %v374, -inf
  %387 = vmax.xlane.f32.xlu0 %v386
  %v388 = vpop.xlane.xlu0 %387
  %v389 = vsub.f32 %v359, %v379
  %v390 = vsub.f32 %v364, %v382
  %v391 = vsub.f32 %v369, %v385
  %v392 = vsub.f32 %v374, %v388
  %v393 = vmul.f32 %v389, 1.442695
  %v394 = vpow.pop %v393
  %v395 = vmul.f32 %v390, 1.442695
  %v396 = vpow.pop %v395
  %v397 = vmul.f32 %v391, 1.442695
  %v398 = vpow.pop %v397
  %v399 = vmul.f32 %v392, 1.442695
  %v400 = vpow.pop %v399
  %v401 = vsel %vm279, %v394, 0.0
  %402 = vadd.xlane.f32.xlu0 %v401
  %v403 = vpop.xlane.xlu0 %402
  %v404 = vsel %vm279, %v396, 0.0
  %405 = vadd.xlane.f32.xlu0 %v404
  %v406 = vpop.xlane.xlu0 %405
  %v407 = vsel %vm279, %v398, 0.0
  %408 = vadd.xlane.f32.xlu0 %v407
  %v409 = vpop.xlane.xlu0 %408
  %v410 = vsel %vm279, %v400, 0.0
  %411 = vadd.xlane.f32.xlu0 %v410
  %v412 = vpop.xlane.xlu0 %411
  %v413 = vrcp.pop %v403
  %v414 = vrcp.pop %v406
  %v415 = vrcp.pop %v409
  %v416 = vrcp.pop %v412
  %v417 = vmul.f32 %v394, %v413
  %v418 = vmul.f32 %v396, %v414
  %v419 = vmul.f32 %v398, %v415
  %v420 = vmul.f32 %v400, %v416
  %421 = vrot.lane.b32.xlu0 %v255, 32
  %v422 = vpop.permute.xlu0 %421
  %423 = vrot.lane.b32.xlu0 %v256, 32
  %v424 = vpop.permute.xlu0 %423
  %v428 = vsel %vm279, %v417, 0
  %v431 = vsel %vm279, %v418, 0
  %v434 = vsel %vm279, %v419, 0
  %v437 = vsel %vm279, %v420, 0
  %439 = vmatprep.subr.mxu0 0.0
  %440 = vmatpush1.msra.mxu0 0.0
  %441 = vmatprep.subr.mxu0 0.0
  %442 = vmatpush1.msra.mxu0 0.0
  %443 = vmatprep.subr.mxu0 0.0
  %444 = vmatpush1.msra.mxu0 0.0
  %445 = vmatprep.subr.mxu0 0.0
  %446 = vmatpush1.msra.mxu0 0.0
  %447 = vmatprep.subr.mxu0 0.0
  %448 = vmatpush1.msra.mxu0 0.0
  %449 = vmatprep.subr.mxu0 0.0
  %450 = vmatpush1.msra.mxu0 0.0
  %451 = vmatprep.subr.mxu0 0.0
  %452 = vmatpush1.msra.mxu0 0.0
  %453 = vmatprep.subr.mxu0 0.0
  %454 = vmatpush1.msra.mxu0 0.0
  %455 = vmatprep.subr.mxu0 0.0
  %456 = vmatpush1.msra.mxu0 0.0
  %457 = vmatprep.subr.mxu0 0.0
  %458 = vmatpush1.msra.mxu0 0.0
  %459 = vmatprep.subr.mxu0 0.0
  %460 = vmatpush1.msra.mxu0 0.0
  %461 = vmatprep.subr.mxu0 0.0
  %462 = vmatpush1.msra.mxu0 0.0
  %463 = vmatprep.subr.mxu0 0.0
  %464 = vmatpush1.msra.mxu0 0.0
  %465 = vmatprep.subr.mxu0 0.0
  %466 = vmatpush1.msra.mxu0 0.0
  %467 = vmatprep.subr.mxu0 0.0
  %468 = vmatpush1.msra.mxu0 %v424
  %469 = vmatprep.subr.mxu0 0.0
  %470 = vmatpush1.msra.mxu0 %v422
  %471 = vmatprep.subr.mxu0 0.0
  %472 = vmatpush2.msra.mxu0 0.0
  %473 = vmatprep.subr.mxu0 0.0
  %474 = vmatpush2.msra.mxu0 0.0
  %475 = vmatprep.subr.mxu0 0.0
  %476 = vmatpush2.msra.mxu0 0.0
  %477 = vmatprep.subr.mxu0 0.0
  %478 = vmatpush2.msra.mxu0 0.0
  %479 = vmatprep.subr.mxu0 0.0
  %480 = vmatpush2.msra.mxu0 0.0
  %481 = vmatprep.subr.mxu0 0.0
  %482 = vmatpush2.msra.mxu0 0.0
  %483 = vmatprep.subr.mxu0 0.0
  %484 = vmatpush2.msra.mxu0 0.0
  %485 = vmatprep.subr.mxu0 0.0
  %486 = vmatpush2.msra.mxu0 0.0
  %487 = vmatprep.subr.mxu0 0.0
  %488 = vmatpush2.msra.mxu0 0.0
  %489 = vmatprep.subr.mxu0 0.0
  %490 = vmatpush2.msra.mxu0 0.0
  %491 = vmatprep.subr.mxu0 0.0
  %492 = vmatpush2.msra.mxu0 0.0
  %493 = vmatprep.subr.mxu0 0.0
  %494 = vmatpush2.msra.mxu0 0.0
  %495 = vmatprep.subr.mxu0 0.0
  %496 = vmatpush2.msra.mxu0 0.0
  %497 = vmatprep.subr.mxu0 0.0
  %498 = vmatpush2.msra.mxu0 0.0
  %499 = vmatprep.subr.mxu0 0.0
  %500 = vmatpush2.msra.mxu0 0.0
  %501 = vmatprep.subr.mxu0 0.0
  %502 = vmatpush2.msra.mxu0 0.0
  %503 = vmatprep.mubr.f32.mxu0 0.0
  %504 = vmatmul.mubr.f32.gmra.mxu0 %v428
  %v505 = vpop.f32.mrf.mxu0
  %v506 = vadd.f32 0.0, %v505
  %v507 = vpop.f32.mrf.mxu0
  %508 = vmatprep.mubr.f32.mxu0 0.0
  %509 = vmatmul.mubr.f32.gmra.mxu0 %v431
  %v510 = vpop.f32.mrf.mxu0
  %v511 = vadd.f32 0.0, %v510
  %v512 = vpop.f32.mrf.mxu0
  %513 = vmatprep.mubr.f32.mxu0 0.0
  %514 = vmatmul.mubr.f32.gmra.mxu0 %v434
  %v515 = vpop.f32.mrf.mxu0
  %v516 = vadd.f32 0.0, %v515
  %v517 = vpop.f32.mrf.mxu0
  %518 = vmatprep.mubr.f32.mxu0 0.0
  %519 = vmatmul.mubr.f32.gmra.mxu0 %v437
  %v520 = vpop.f32.mrf.mxu0
  %v521 = vadd.f32 0.0, %v520
  %v522 = vpop.f32.mrf.mxu0
  %523 = vdwg.mxu0
  %v525 = vsel %vm279, %v516, 0
  %v528 = vsel %vm279, %v521, 0
  %530 = vmatprep.subr.mxu0 0.0
  %531 = vmatpush1.msra.mxu0 0.0
  %532 = vmatprep.subr.mxu0 0.0
  %533 = vmatpush1.msra.mxu0 0.0
  %534 = vmatprep.subr.mxu0 0.0
  %535 = vmatpush1.msra.mxu0 0.0
  %536 = vmatprep.subr.mxu0 0.0
  %537 = vmatpush1.msra.mxu0 0.0
  %538 = vmatprep.subr.mxu0 0.0
  %539 = vmatpush1.msra.mxu0 0.0
  %540 = vmatprep.subr.mxu0 0.0
  %541 = vmatpush1.msra.mxu0 0.0
  %542 = vmatprep.subr.mxu0 0.0
  %543 = vmatpush1.msra.mxu0 0.0
  %544 = vmatprep.subr.mxu0 0.0
  %545 = vmatpush1.msra.mxu0 0.0
  %546 = vmatprep.subr.mxu0 0.0
  %547 = vmatpush1.msra.mxu0 0.0
  %548 = vmatprep.subr.mxu0 0.0
  %549 = vmatpush1.msra.mxu0 0.0
  %550 = vmatprep.subr.mxu0 0.0
  %551 = vmatpush1.msra.mxu0 0.0
  %552 = vmatprep.subr.mxu0 0.0
  %553 = vmatpush1.msra.mxu0 0.0
  %554 = vmatprep.subr.mxu0 0.0
  %555 = vmatpush1.msra.mxu0 0.0
  %556 = vmatprep.subr.mxu0 0.0
  %557 = vmatpush1.msra.mxu0 0.0
  %558 = vmatprep.subr.mxu0 0.0
  %559 = vmatpush1.msra.mxu0 %v264
  %560 = vmatprep.subr.mxu0 0.0
  %561 = vmatpush1.msra.mxu0 %v263
  %562 = vmatprep.subr.mxu0 0.0
  %563 = vmatpush2.msra.mxu0 0.0
  %564 = vmatprep.subr.mxu0 0.0
  %565 = vmatpush2.msra.mxu0 0.0
  %566 = vmatprep.subr.mxu0 0.0
  %567 = vmatpush2.msra.mxu0 0.0
  %568 = vmatprep.subr.mxu0 0.0
  %569 = vmatpush2.msra.mxu0 0.0
  %570 = vmatprep.subr.mxu0 0.0
  %571 = vmatpush2.msra.mxu0 0.0
  %572 = vmatprep.subr.mxu0 0.0
  %573 = vmatpush2.msra.mxu0 0.0
  %574 = vmatprep.subr.mxu0 0.0
  %575 = vmatpush2.msra.mxu0 0.0
  %576 = vmatprep.subr.mxu0 0.0
  %577 = vmatpush2.msra.mxu0 0.0
  %578 = vmatprep.subr.mxu0 0.0
  %579 = vmatpush2.msra.mxu0 0.0
  %580 = vmatprep.subr.mxu0 0.0
  %581 = vmatpush2.msra.mxu0 0.0
  %582 = vmatprep.subr.mxu0 0.0
  %583 = vmatpush2.msra.mxu0 0.0
  %584 = vmatprep.subr.mxu0 0.0
  %585 = vmatpush2.msra.mxu0 0.0
  %586 = vmatprep.subr.mxu0 0.0
  %587 = vmatpush2.msra.mxu0 0.0
  %588 = vmatprep.subr.mxu0 0.0
  %589 = vmatpush2.msra.mxu0 0.0
  %590 = vmatprep.subr.mxu0 0.0
  %591 = vmatpush2.msra.mxu0 0.0
  %592 = vmatprep.subr.mxu0 0.0
  %593 = vmatpush2.msra.mxu0 0.0
  %594 = vmatprep.mubr.f32.mxu0 0.0
  %595 = vmatmul.mubr.f32.gmra.mxu0 %v525
  %v596 = vpop.f32.mrf.mxu0
  %v597 = vadd.f32 0.0, %v596
  %v598 = vpop.f32.mrf.mxu0
  %599 = vmatprep.mubr.f32.mxu0 0.0
  %600 = vmatmul.mubr.f32.gmra.mxu0 %v528
  %v601 = vpop.f32.mrf.mxu0
  %v602 = vadd.f32 0.0, %v601
  %v603 = vpop.f32.mrf.mxu0
  %604 = vdwg.mxu0
  %v606 = vsel %vm279, %v506, 0
  %v609 = vsel %vm279, %v511, 0
  %611 = vmatprep.subr.mxu0 0.0
  %612 = vmatpush1.msra.mxu0 0.0
  %613 = vmatprep.subr.mxu0 0.0
  %614 = vmatpush1.msra.mxu0 0.0
  %615 = vmatprep.subr.mxu0 0.0
  %616 = vmatpush1.msra.mxu0 0.0
  %617 = vmatprep.subr.mxu0 0.0
  %618 = vmatpush1.msra.mxu0 0.0
  %619 = vmatprep.subr.mxu0 0.0
  %620 = vmatpush1.msra.mxu0 0.0
  %621 = vmatprep.subr.mxu0 0.0
  %622 = vmatpush1.msra.mxu0 0.0
  %623 = vmatprep.subr.mxu0 0.0
  %624 = vmatpush1.msra.mxu0 0.0
  %625 = vmatprep.subr.mxu0 0.0
  %626 = vmatpush1.msra.mxu0 0.0
  %627 = vmatprep.subr.mxu0 0.0
  %628 = vmatpush1.msra.mxu0 0.0
  %629 = vmatprep.subr.mxu0 0.0
  %630 = vmatpush1.msra.mxu0 0.0
  %631 = vmatprep.subr.mxu0 0.0
  %632 = vmatpush1.msra.mxu0 0.0
  %633 = vmatprep.subr.mxu0 0.0
  %634 = vmatpush1.msra.mxu0 0.0
  %635 = vmatprep.subr.mxu0 0.0
  %636 = vmatpush1.msra.mxu0 0.0
  %637 = vmatprep.subr.mxu0 0.0
  %638 = vmatpush1.msra.mxu0 0.0
  %639 = vmatprep.subr.mxu0 0.0
  %640 = vmatpush1.msra.mxu0 %v262
  %641 = vmatprep.subr.mxu0 0.0
  %642 = vmatpush1.msra.mxu0 %v261
  %643 = vmatprep.subr.mxu0 0.0
  %644 = vmatpush2.msra.mxu0 0.0
  %645 = vmatprep.subr.mxu0 0.0
  %646 = vmatpush2.msra.mxu0 0.0
  %647 = vmatprep.subr.mxu0 0.0
  %648 = vmatpush2.msra.mxu0 0.0
  %649 = vmatprep.subr.mxu0 0.0
  %650 = vmatpush2.msra.mxu0 0.0
  %651 = vmatprep.subr.mxu0 0.0
  %652 = vmatpush2.msra.mxu0 0.0
  %653 = vmatprep.subr.mxu0 0.0
  %654 = vmatpush2.msra.mxu0 0.0
  %655 = vmatprep.subr.mxu0 0.0
  %656 = vmatpush2.msra.mxu0 0.0
  %657 = vmatprep.subr.mxu0 0.0
  %658 = vmatpush2.msra.mxu0 0.0
  %659 = vmatprep.subr.mxu0 0.0
  %660 = vmatpush2.msra.mxu0 0.0
  %661 = vmatprep.subr.mxu0 0.0
  %662 = vmatpush2.msra.mxu0 0.0
  %663 = vmatprep.subr.mxu0 0.0
  %664 = vmatpush2.msra.mxu0 0.0
  %665 = vmatprep.subr.mxu0 0.0
  %666 = vmatpush2.msra.mxu0 0.0
  %667 = vmatprep.subr.mxu0 0.0
  %668 = vmatpush2.msra.mxu0 0.0
  %669 = vmatprep.subr.mxu0 0.0
  %670 = vmatpush2.msra.mxu0 0.0
  %671 = vmatprep.subr.mxu0 0.0
  %672 = vmatpush2.msra.mxu0 0.0
  %673 = vmatprep.subr.mxu0 0.0
  %674 = vmatpush2.msra.mxu0 0.0
  %675 = vmatprep.mubr.f32.mxu0 0.0
  %676 = vmatmul.mubr.f32.gmra.mxu0 %v606
  %v677 = vpop.f32.mrf.mxu0
  %v678 = vadd.f32 %v597, %v677
  %v679 = vpop.f32.mrf.mxu0
  %680 = vmatprep.mubr.f32.mxu0 0.0
  %681 = vmatmul.mubr.f32.gmra.mxu0 %v609
  %v682 = vpop.f32.mrf.mxu0
  %v683 = vadd.f32 %v602, %v682
  %v684 = vpop.f32.mrf.mxu0
  %685 = vdwg.mxu0
  %686 = vrot.lane.b32.xlu0 %v255, 96
  %v687 = vpop.permute.xlu0 %686
  %688 = vrot.lane.b32.xlu0 %v256, 96
  %v689 = vpop.permute.xlu0 %688
  %690 = vrot.lane.b32.xlu0 %v272, 96
  %v691 = vpop.permute.xlu0 %690
  %692 = vrot.lane.b32.xlu0 %v274, 96
  %v693 = vpop.permute.xlu0 %692
  %694 = vrot.lane.b32.xlu0 %v255, 48
  %v695 = vpop.permute.xlu0 %694
  %696 = vrot.lane.b32.xlu0 %v256, 48
  %v697 = vpop.permute.xlu0 %696
  %v698 = vsel %vm279, %v687, 0
  %v700 = vsel %vm279, %v689, 0
  %v702 = vsel %vm279, %v691, 0
  %v704 = vsel %vm279, %v693, 0
  %v706 = vsel %vm279, %v695, 0
  %v708 = vsel %vm279, %v697, 0
  %710 = vmatprep.subr.mxu0 0.0
  %711 = vmatpush1.xpose.msra.mxu0 0.0
  %712 = vmatprep.subr.mxu0 0.0
  %713 = vmatpush1.xpose.msra.mxu0 0.0
  %714 = vmatprep.subr.mxu0 0.0
  %715 = vmatpush1.xpose.msra.mxu0 0.0
  %716 = vmatprep.subr.mxu0 0.0
  %717 = vmatpush1.xpose.msra.mxu0 0.0
  %718 = vmatprep.subr.mxu0 0.0
  %719 = vmatpush1.xpose.msra.mxu0 0.0
  %720 = vmatprep.subr.mxu0 0.0
  %721 = vmatpush1.xpose.msra.mxu0 0.0
  %722 = vmatprep.subr.mxu0 0.0
  %723 = vmatpush1.xpose.msra.mxu0 0.0
  %724 = vmatprep.subr.mxu0 0.0
  %725 = vmatpush1.xpose.msra.mxu0 0.0
  %726 = vmatprep.subr.mxu0 0.0
  %727 = vmatpush1.xpose.msra.mxu0 0.0
  %728 = vmatprep.subr.mxu0 0.0
  %729 = vmatpush1.xpose.msra.mxu0 0.0
  %730 = vmatprep.subr.mxu0 0.0
  %731 = vmatpush1.xpose.msra.mxu0 0.0
  %732 = vmatprep.subr.mxu0 0.0
  %733 = vmatpush1.xpose.msra.mxu0 0.0
  %734 = vmatprep.subr.mxu0 0.0
  %735 = vmatpush1.xpose.msra.mxu0 0.0
  %736 = vmatprep.subr.mxu0 0.0
  %737 = vmatpush1.xpose.msra.mxu0 0.0
  %738 = vmatprep.subr.mxu0 0.0
  %739 = vmatpush1.xpose.msra.mxu0 %v708
  %740 = vmatprep.subr.mxu0 0.0
  %741 = vmatpush1.xpose.msra.mxu0 %v706
  %742 = vmatprep.subr.mxu0 0.0
  %743 = vmatpush2.xpose.msra.mxu0 0.0
  %744 = vmatprep.subr.mxu0 0.0
  %745 = vmatpush2.xpose.msra.mxu0 0.0
  %746 = vmatprep.subr.mxu0 0.0
  %747 = vmatpush2.xpose.msra.mxu0 0.0
  %748 = vmatprep.subr.mxu0 0.0
  %749 = vmatpush2.xpose.msra.mxu0 0.0
  %750 = vmatprep.subr.mxu0 0.0
  %751 = vmatpush2.xpose.msra.mxu0 0.0
  %752 = vmatprep.subr.mxu0 0.0
  %753 = vmatpush2.xpose.msra.mxu0 0.0
  %754 = vmatprep.subr.mxu0 0.0
  %755 = vmatpush2.xpose.msra.mxu0 0.0
  %756 = vmatprep.subr.mxu0 0.0
  %757 = vmatpush2.xpose.msra.mxu0 0.0
  %758 = vmatprep.subr.mxu0 0.0
  %759 = vmatpush2.xpose.msra.mxu0 0.0
  %760 = vmatprep.subr.mxu0 0.0
  %761 = vmatpush2.xpose.msra.mxu0 0.0
  %762 = vmatprep.subr.mxu0 0.0
  %763 = vmatpush2.xpose.msra.mxu0 0.0
  %764 = vmatprep.subr.mxu0 0.0
  %765 = vmatpush2.xpose.msra.mxu0 0.0
  %766 = vmatprep.subr.mxu0 0.0
  %767 = vmatpush2.xpose.msra.mxu0 0.0
  %768 = vmatprep.subr.mxu0 0.0
  %769 = vmatpush2.xpose.msra.mxu0 0.0
  %770 = vmatprep.subr.mxu0 0.0
  %771 = vmatpush2.xpose.msra.mxu0 0.0
  %772 = vmatprep.subr.mxu0 0.0
  %773 = vmatpush2.xpose.msra.mxu0 0.0
  %774 = vmatprep.mubr.f32.mxu0 0.0
  %775 = vmatmul.mubr.f32.gmra.mxu0 %v698
  %v776 = vpop.f32.mrf.mxu0
  %v777 = vadd.f32 %v257, %v776
  %v778 = vpop.f32.mrf.mxu0
  %779 = vmatprep.mubr.f32.mxu0 0.0
  %780 = vmatmul.mubr.f32.gmra.mxu0 %v700
  %v781 = vpop.f32.mrf.mxu0
  %v782 = vadd.f32 %v258, %v781
  %v783 = vpop.f32.mrf.mxu0
  %784 = vmatprep.mubr.f32.mxu0 0.0
  %785 = vmatmul.mubr.f32.gmra.mxu0 %v702
  %v786 = vpop.f32.mrf.mxu0
  %v787 = vadd.f32 %v259, %v786
  %v788 = vpop.f32.mrf.mxu0
  %789 = vmatprep.mubr.f32.mxu0 0.0
  %790 = vmatmul.mubr.f32.gmra.mxu0 %v704
  %v791 = vpop.f32.mrf.mxu0
  %v792 = vadd.f32 %v260, %v791
  %v793 = vpop.f32.mrf.mxu0
  %794 = vdwg.mxu0
  %v795 = vsel %vm279, %v777, -inf
  %796 = vmax.xlane.f32.xlu0 %v795
  %v797 = vpop.xlane.xlu0 %796
  %v798 = vsel %vm279, %v782, -inf
  %799 = vmax.xlane.f32.xlu0 %v798
  %v800 = vpop.xlane.xlu0 %799
  %v801 = vsel %vm279, %v787, -inf
  %802 = vmax.xlane.f32.xlu0 %v801
  %v803 = vpop.xlane.xlu0 %802
  %v804 = vsel %vm279, %v792, -inf
  %805 = vmax.xlane.f32.xlu0 %v804
  %v806 = vpop.xlane.xlu0 %805
  %v807 = vsub.f32 %v777, %v797
  %v808 = vsub.f32 %v782, %v800
  %v809 = vsub.f32 %v787, %v803
  %v810 = vsub.f32 %v792, %v806
  %v811 = vmul.f32 %v807, 1.442695
  %v812 = vpow.pop %v811
  %v813 = vmul.f32 %v808, 1.442695
  %v814 = vpow.pop %v813
  %v815 = vmul.f32 %v809, 1.442695
  %v816 = vpow.pop %v815
  %v817 = vmul.f32 %v810, 1.442695
  %v818 = vpow.pop %v817
  %v819 = vsel %vm279, %v812, 0.0
  %820 = vadd.xlane.f32.xlu0 %v819
  %v821 = vpop.xlane.xlu0 %820
  %v822 = vsel %vm279, %v814, 0.0
  %823 = vadd.xlane.f32.xlu0 %v822
  %v824 = vpop.xlane.xlu0 %823
  %v825 = vsel %vm279, %v816, 0.0
  %826 = vadd.xlane.f32.xlu0 %v825
  %v827 = vpop.xlane.xlu0 %826
  %v828 = vsel %vm279, %v818, 0.0
  %829 = vadd.xlane.f32.xlu0 %v828
  %v830 = vpop.xlane.xlu0 %829
  %v831 = vrcp.pop %v821
  %v832 = vrcp.pop %v824
  %v833 = vrcp.pop %v827
  %v834 = vrcp.pop %v830
  %v835 = vmul.f32 %v812, %v831
  %v836 = vmul.f32 %v814, %v832
  %v837 = vmul.f32 %v816, %v833
  %v838 = vmul.f32 %v818, %v834
  %839 = vrot.lane.b32.xlu0 %v255, 16
  %v840 = vpop.permute.xlu0 %839
  %841 = vrot.lane.b32.xlu0 %v256, 16
  %v842 = vpop.permute.xlu0 %841
  %v846 = vsel %vm279, %v835, 0
  %v849 = vsel %vm279, %v836, 0
  %v852 = vsel %vm279, %v837, 0
  %v855 = vsel %vm279, %v838, 0
  %857 = vmatprep.subr.mxu0 0.0
  %858 = vmatpush1.msra.mxu0 0.0
  %859 = vmatprep.subr.mxu0 0.0
  %860 = vmatpush1.msra.mxu0 0.0
  %861 = vmatprep.subr.mxu0 0.0
  %862 = vmatpush1.msra.mxu0 0.0
  %863 = vmatprep.subr.mxu0 0.0
  %864 = vmatpush1.msra.mxu0 0.0
  %865 = vmatprep.subr.mxu0 0.0
  %866 = vmatpush1.msra.mxu0 0.0
  %867 = vmatprep.subr.mxu0 0.0
  %868 = vmatpush1.msra.mxu0 0.0
  %869 = vmatprep.subr.mxu0 0.0
  %870 = vmatpush1.msra.mxu0 0.0
  %871 = vmatprep.subr.mxu0 0.0
  %872 = vmatpush1.msra.mxu0 0.0
  %873 = vmatprep.subr.mxu0 0.0
  %874 = vmatpush1.msra.mxu0 0.0
  %875 = vmatprep.subr.mxu0 0.0
  %876 = vmatpush1.msra.mxu0 0.0
  %877 = vmatprep.subr.mxu0 0.0
  %878 = vmatpush1.msra.mxu0 0.0
  %879 = vmatprep.subr.mxu0 0.0
  %880 = vmatpush1.msra.mxu0 0.0
  %881 = vmatprep.subr.mxu0 0.0
  %882 = vmatpush1.msra.mxu0 0.0
  %883 = vmatprep.subr.mxu0 0.0
  %884 = vmatpush1.msra.mxu0 0.0
  %885 = vmatprep.subr.mxu0 0.0
  %886 = vmatpush1.msra.mxu0 %v842
  %887 = vmatprep.subr.mxu0 0.0
  %888 = vmatpush1.msra.mxu0 %v840
  %889 = vmatprep.subr.mxu0 0.0
  %890 = vmatpush2.msra.mxu0 0.0
  %891 = vmatprep.subr.mxu0 0.0
  %892 = vmatpush2.msra.mxu0 0.0
  %893 = vmatprep.subr.mxu0 0.0
  %894 = vmatpush2.msra.mxu0 0.0
  %895 = vmatprep.subr.mxu0 0.0
  %896 = vmatpush2.msra.mxu0 0.0
  %897 = vmatprep.subr.mxu0 0.0
  %898 = vmatpush2.msra.mxu0 0.0
  %899 = vmatprep.subr.mxu0 0.0
  %900 = vmatpush2.msra.mxu0 0.0
  %901 = vmatprep.subr.mxu0 0.0
  %902 = vmatpush2.msra.mxu0 0.0
  %903 = vmatprep.subr.mxu0 0.0
  %904 = vmatpush2.msra.mxu0 0.0
  %905 = vmatprep.subr.mxu0 0.0
  %906 = vmatpush2.msra.mxu0 0.0
  %907 = vmatprep.subr.mxu0 0.0
  %908 = vmatpush2.msra.mxu0 0.0
  %909 = vmatprep.subr.mxu0 0.0
  %910 = vmatpush2.msra.mxu0 0.0
  %911 = vmatprep.subr.mxu0 0.0
  %912 = vmatpush2.msra.mxu0 0.0
  %913 = vmatprep.subr.mxu0 0.0
  %914 = vmatpush2.msra.mxu0 0.0
  %915 = vmatprep.subr.mxu0 0.0
  %916 = vmatpush2.msra.mxu0 0.0
  %917 = vmatprep.subr.mxu0 0.0
  %918 = vmatpush2.msra.mxu0 0.0
  %919 = vmatprep.subr.mxu0 0.0
  %920 = vmatpush2.msra.mxu0 0.0
  %921 = vmatprep.mubr.f32.mxu0 0.0
  %922 = vmatmul.mubr.f32.gmra.mxu0 %v846
  %v923 = vpop.f32.mrf.mxu0
  %v924 = vadd.f32 0.0, %v923
  %v925 = vpop.f32.mrf.mxu0
  %926 = vmatprep.mubr.f32.mxu0 0.0
  %927 = vmatmul.mubr.f32.gmra.mxu0 %v849
  %v928 = vpop.f32.mrf.mxu0
  %v929 = vadd.f32 0.0, %v928
  %v930 = vpop.f32.mrf.mxu0
  %931 = vmatprep.mubr.f32.mxu0 0.0
  %932 = vmatmul.mubr.f32.gmra.mxu0 %v852
  %v933 = vpop.f32.mrf.mxu0
  %v934 = vadd.f32 0.0, %v933
  %v935 = vpop.f32.mrf.mxu0
  %936 = vmatprep.mubr.f32.mxu0 0.0
  %937 = vmatmul.mubr.f32.gmra.mxu0 %v855
  %v938 = vpop.f32.mrf.mxu0
  %v939 = vadd.f32 0.0, %v938
  %v940 = vpop.f32.mrf.mxu0
  %941 = vdwg.mxu0
  %v943 = vsel %vm279, %v924, 0
  %v946 = vsel %vm279, %v929, 0
  %948 = vmatprep.subr.mxu0 0.0
  %949 = vmatpush1.msra.mxu0 0.0
  %950 = vmatprep.subr.mxu0 0.0
  %951 = vmatpush1.msra.mxu0 0.0
  %952 = vmatprep.subr.mxu0 0.0
  %953 = vmatpush1.msra.mxu0 0.0
  %954 = vmatprep.subr.mxu0 0.0
  %955 = vmatpush1.msra.mxu0 0.0
  %956 = vmatprep.subr.mxu0 0.0
  %957 = vmatpush1.msra.mxu0 0.0
  %958 = vmatprep.subr.mxu0 0.0
  %959 = vmatpush1.msra.mxu0 0.0
  %960 = vmatprep.subr.mxu0 0.0
  %961 = vmatpush1.msra.mxu0 0.0
  %962 = vmatprep.subr.mxu0 0.0
  %963 = vmatpush1.msra.mxu0 0.0
  %964 = vmatprep.subr.mxu0 0.0
  %965 = vmatpush1.msra.mxu0 0.0
  %966 = vmatprep.subr.mxu0 0.0
  %967 = vmatpush1.msra.mxu0 0.0
  %968 = vmatprep.subr.mxu0 0.0
  %969 = vmatpush1.msra.mxu0 0.0
  %970 = vmatprep.subr.mxu0 0.0
  %971 = vmatpush1.msra.mxu0 0.0
  %972 = vmatprep.subr.mxu0 0.0
  %973 = vmatpush1.msra.mxu0 0.0
  %974 = vmatprep.subr.mxu0 0.0
  %975 = vmatpush1.msra.mxu0 0.0
  %976 = vmatprep.subr.mxu0 0.0
  %977 = vmatpush1.msra.mxu0 %v266
  %978 = vmatprep.subr.mxu0 0.0
  %979 = vmatpush1.msra.mxu0 %v265
  %980 = vmatprep.subr.mxu0 0.0
  %981 = vmatpush2.msra.mxu0 0.0
  %982 = vmatprep.subr.mxu0 0.0
  %983 = vmatpush2.msra.mxu0 0.0
  %984 = vmatprep.subr.mxu0 0.0
  %985 = vmatpush2.msra.mxu0 0.0
  %986 = vmatprep.subr.mxu0 0.0
  %987 = vmatpush2.msra.mxu0 0.0
  %988 = vmatprep.subr.mxu0 0.0
  %989 = vmatpush2.msra.mxu0 0.0
  %990 = vmatprep.subr.mxu0 0.0
  %991 = vmatpush2.msra.mxu0 0.0
  %992 = vmatprep.subr.mxu0 0.0
  %993 = vmatpush2.msra.mxu0 0.0
  %994 = vmatprep.subr.mxu0 0.0
  %995 = vmatpush2.msra.mxu0 0.0
  %996 = vmatprep.subr.mxu0 0.0
  %997 = vmatpush2.msra.mxu0 0.0
  %998 = vmatprep.subr.mxu0 0.0
  %999 = vmatpush2.msra.mxu0 0.0
  %1000 = vmatprep.subr.mxu0 0.0
  %1001 = vmatpush2.msra.mxu0 0.0
  %1002 = vmatprep.subr.mxu0 0.0
  %1003 = vmatpush2.msra.mxu0 0.0
  %1004 = vmatprep.subr.mxu0 0.0
  %1005 = vmatpush2.msra.mxu0 0.0
  %1006 = vmatprep.subr.mxu0 0.0
  %1007 = vmatpush2.msra.mxu0 0.0
  %1008 = vmatprep.subr.mxu0 0.0
  %1009 = vmatpush2.msra.mxu0 0.0
  %1010 = vmatprep.subr.mxu0 0.0
  %1011 = vmatpush2.msra.mxu0 0.0
  %1012 = vmatprep.mubr.f32.mxu0 0.0
  %1013 = vmatmul.mubr.f32.gmra.mxu0 %v943
  %v1014 = vpop.f32.mrf.mxu0
  %v1015 = vadd.f32 0.0, %v1014
  %v1016 = vpop.f32.mrf.mxu0
  %1017 = vmatprep.mubr.f32.mxu0 0.0
  %1018 = vmatmul.mubr.f32.gmra.mxu0 %v946
  %v1019 = vpop.f32.mrf.mxu0
  %v1020 = vadd.f32 0.0, %v1019
  %v1021 = vpop.f32.mrf.mxu0
  %1022 = vdwg.mxu0
  %v1023 = vadd.f32 %v678, %v1015
  %v1024 = vadd.f32 %v683, %v1020
  %v1026 = vsel %vm279, %v934, 0
  %v1029 = vsel %vm279, %v939, 0
  %1031 = vmatprep.subr.mxu0 0.0
  %1032 = vmatpush1.msra.mxu0 0.0
  %1033 = vmatprep.subr.mxu0 0.0
  %1034 = vmatpush1.msra.mxu0 0.0
  %1035 = vmatprep.subr.mxu0 0.0
  %1036 = vmatpush1.msra.mxu0 0.0
  %1037 = vmatprep.subr.mxu0 0.0
  %1038 = vmatpush1.msra.mxu0 0.0
  %1039 = vmatprep.subr.mxu0 0.0
  %1040 = vmatpush1.msra.mxu0 0.0
  %1041 = vmatprep.subr.mxu0 0.0
  %1042 = vmatpush1.msra.mxu0 0.0
  %1043 = vmatprep.subr.mxu0 0.0
  %1044 = vmatpush1.msra.mxu0 0.0
  %1045 = vmatprep.subr.mxu0 0.0
  %1046 = vmatpush1.msra.mxu0 0.0
  %1047 = vmatprep.subr.mxu0 0.0
  %1048 = vmatpush1.msra.mxu0 0.0
  %1049 = vmatprep.subr.mxu0 0.0
  %1050 = vmatpush1.msra.mxu0 0.0
  %1051 = vmatprep.subr.mxu0 0.0
  %1052 = vmatpush1.msra.mxu0 0.0
  %1053 = vmatprep.subr.mxu0 0.0
  %1054 = vmatpush1.msra.mxu0 0.0
  %1055 = vmatprep.subr.mxu0 0.0
  %1056 = vmatpush1.msra.mxu0 0.0
  %1057 = vmatprep.subr.mxu0 0.0
  %1058 = vmatpush1.msra.mxu0 0.0
  %1059 = vmatprep.subr.mxu0 0.0
  %1060 = vmatpush1.msra.mxu0 %v268
  %1061 = vmatprep.subr.mxu0 0.0
  %1062 = vmatpush1.msra.mxu0 %v267
  %1063 = vmatprep.subr.mxu0 0.0
  %1064 = vmatpush2.msra.mxu0 0.0
  %1065 = vmatprep.subr.mxu0 0.0
  %1066 = vmatpush2.msra.mxu0 0.0
  %1067 = vmatprep.subr.mxu0 0.0
  %1068 = vmatpush2.msra.mxu0 0.0
  %1069 = vmatprep.subr.mxu0 0.0
  %1070 = vmatpush2.msra.mxu0 0.0
  %1071 = vmatprep.subr.mxu0 0.0
  %1072 = vmatpush2.msra.mxu0 0.0
  %1073 = vmatprep.subr.mxu0 0.0
  %1074 = vmatpush2.msra.mxu0 0.0
  %1075 = vmatprep.subr.mxu0 0.0
  %1076 = vmatpush2.msra.mxu0 0.0
  %1077 = vmatprep.subr.mxu0 0.0
  %1078 = vmatpush2.msra.mxu0 0.0
  %1079 = vmatprep.subr.mxu0 0.0
  %1080 = vmatpush2.msra.mxu0 0.0
  %1081 = vmatprep.subr.mxu0 0.0
  %1082 = vmatpush2.msra.mxu0 0.0
  %1083 = vmatprep.subr.mxu0 0.0
  %1084 = vmatpush2.msra.mxu0 0.0
  %1085 = vmatprep.subr.mxu0 0.0
  %1086 = vmatpush2.msra.mxu0 0.0
  %1087 = vmatprep.subr.mxu0 0.0
  %1088 = vmatpush2.msra.mxu0 0.0
  %1089 = vmatprep.subr.mxu0 0.0
  %1090 = vmatpush2.msra.mxu0 0.0
  %1091 = vmatprep.subr.mxu0 0.0
  %1092 = vmatpush2.msra.mxu0 0.0
  %1093 = vmatprep.subr.mxu0 0.0
  %1094 = vmatpush2.msra.mxu0 0.0
  %1095 = vmatprep.mubr.f32.mxu0 0.0
  %1096 = vmatmul.mubr.f32.gmra.mxu0 %v1026
  %v1097 = vpop.f32.mrf.mxu0
  %v1098 = vadd.f32 0.0, %v1097
  %v1099 = vpop.f32.mrf.mxu0
  %1100 = vmatprep.mubr.f32.mxu0 0.0
  %1101 = vmatmul.mubr.f32.gmra.mxu0 %v1029
  %v1102 = vpop.f32.mrf.mxu0
  %v1103 = vadd.f32 0.0, %v1102
  %v1104 = vpop.f32.mrf.mxu0
  %1105 = vdwg.mxu0
  %v1106 = vadd.f32 %v1023, %v1098
  %v1107 = vadd.f32 %v1024, %v1103
  %v1108 = vadd.f32 %v38, %v1106
  %v1109 = vadd.f32 %v39, %v1107
  %v1110 = vmul.f32 %v1108, %v1108
  %v1111 = vmul.f32 %v1109, %v1109
  %v1112 = vsel %vm42, %v1110, 0.0
  %1113 = vadd.xlane.f32.xlu0 %v1112
  %v1114 = vpop.xlane.xlu0 %1113
  %v1115 = vsel %vm42, %v1111, 0.0
  %1116 = vadd.xlane.f32.xlu0 %v1115
  %v1117 = vpop.xlane.xlu0 %1116
  %v1118 = vmul.f32 %v1114, %v49
  %v1119 = vmul.f32 %v1117, %v49
  %v1120 = vadd.f32 %v1118, 1e-05
  %v1121 = vadd.f32 %v1119, 1e-05
  %v1122 = vrsqrt.pop %v1120
  %v1123 = vrsqrt.pop %v1121
  %v1124 = vmul.f32 %v1108, %v1122
  %v1125 = vmul.f32 %v1109, %v1123
  %v1126 = vld [vmem:[%s8] sm:$0x1]
  %v1128 = vlaneseq
  %v1129 = vshrl.u32 %v1128, 7
  %v1130 = vsub.s32 0, %v1129
  %v1131 = vrot.slane %v1126, %v1130
  %v1133 = vmul.f32 %v1124, %v1131
  %v1134 = vmul.f32 %v1125, %v1131
  %v1135 = vld [vmem:[%s9] sm:$0xff]
  %v1136 = vld [vmem:[%s9 + $0x8] sm:$0xff]
  %v1137 = vld [vmem:[%s9 + $0x10] sm:$0xff]
  %v1138 = vld [vmem:[%s9 + $0x18] sm:$0xff]
  %v1139 = vld [vmem:[%s9 + $0x20] sm:$0xff]
  %v1140 = vld [vmem:[%s9 + $0x28] sm:$0xff]
  %v1141 = vld [vmem:[%s9 + $0x30] sm:$0xff]
  %v1142 = vld [vmem:[%s9 + $0x38] sm:$0xff]
  %v1143 = vld [vmem:[%s9 + $0x40] sm:$0xff]
  %v1144 = vld [vmem:[%s9 + $0x48] sm:$0xff]
  %v1145 = vld [vmem:[%s9 + $0x50] sm:$0xff]
  %v1146 = vld [vmem:[%s9 + $0x58] sm:$0xff]
  %v1147 = vld [vmem:[%s9 + $0x60] sm:$0xff]
  %v1148 = vld [vmem:[%s9 + $0x68] sm:$0xff]
  %v1149 = vld [vmem:[%s9 + $0x70] sm:$0xff]
  %v1150 = vld [vmem:[%s9 + $0x78] sm:$0xff]
  %v1152 = vsel %vm42, %v1133, 0
  %v1155 = vsel %vm42, %v1134, 0
  %1157 = vmatprep.subr.mxu0 0.0
  %1158 = vmatpush1.msra.mxu0 0.0
  %1159 = vmatprep.subr.mxu0 0.0
  %1160 = vmatpush1.msra.mxu0 0.0
  %1161 = vmatprep.subr.mxu0 0.0
  %1162 = vmatpush1.msra.mxu0 0.0
  %1163 = vmatprep.subr.mxu0 0.0
  %1164 = vmatpush1.msra.mxu0 0.0
  %1165 = vmatprep.subr.mxu0 0.0
  %1166 = vmatpush1.msra.mxu0 0.0
  %1167 = vmatprep.subr.mxu0 0.0
  %1168 = vmatpush1.msra.mxu0 0.0
  %1169 = vmatprep.subr.mxu0 0.0
  %1170 = vmatpush1.msra.mxu0 0.0
  %1171 = vmatprep.subr.mxu0 0.0
  %1172 = vmatpush1.msra.mxu0 0.0
  %1173 = vmatprep.subr.mxu0 %v1150
  %1174 = vmatpush1.msra.mxu0 %v1149
  %1175 = vmatprep.subr.mxu0 %v1148
  %1176 = vmatpush1.msra.mxu0 %v1147
  %1177 = vmatprep.subr.mxu0 %v1146
  %1178 = vmatpush1.msra.mxu0 %v1145
  %1179 = vmatprep.subr.mxu0 %v1144
  %1180 = vmatpush1.msra.mxu0 %v1143
  %1181 = vmatprep.subr.mxu0 %v1142
  %1182 = vmatpush1.msra.mxu0 %v1141
  %1183 = vmatprep.subr.mxu0 %v1140
  %1184 = vmatpush1.msra.mxu0 %v1139
  %1185 = vmatprep.subr.mxu0 %v1138
  %1186 = vmatpush1.msra.mxu0 %v1137
  %1187 = vmatprep.subr.mxu0 %v1136
  %1188 = vmatpush1.msra.mxu0 %v1135
  %1189 = vmatprep.subr.mxu0 0.0
  %1190 = vmatpush2.msra.mxu0 0.0
  %1191 = vmatprep.subr.mxu0 0.0
  %1192 = vmatpush2.msra.mxu0 0.0
  %1193 = vmatprep.subr.mxu0 0.0
  %1194 = vmatpush2.msra.mxu0 0.0
  %1195 = vmatprep.subr.mxu0 0.0
  %1196 = vmatpush2.msra.mxu0 0.0
  %1197 = vmatprep.subr.mxu0 0.0
  %1198 = vmatpush2.msra.mxu0 0.0
  %1199 = vmatprep.subr.mxu0 0.0
  %1200 = vmatpush2.msra.mxu0 0.0
  %1201 = vmatprep.subr.mxu0 0.0
  %1202 = vmatpush2.msra.mxu0 0.0
  %1203 = vmatprep.subr.mxu0 0.0
  %1204 = vmatpush2.msra.mxu0 0.0
  %1205 = vmatprep.subr.mxu0 0.0
  %1206 = vmatpush2.msra.mxu0 0.0
  %1207 = vmatprep.subr.mxu0 0.0
  %1208 = vmatpush2.msra.mxu0 0.0
  %1209 = vmatprep.subr.mxu0 0.0
  %1210 = vmatpush2.msra.mxu0 0.0
  %1211 = vmatprep.subr.mxu0 0.0
  %1212 = vmatpush2.msra.mxu0 0.0
  %1213 = vmatprep.subr.mxu0 0.0
  %1214 = vmatpush2.msra.mxu0 0.0
  %1215 = vmatprep.subr.mxu0 0.0
  %1216 = vmatpush2.msra.mxu0 0.0
  %1217 = vmatprep.subr.mxu0 0.0
  %1218 = vmatpush2.msra.mxu0 0.0
  %1219 = vmatprep.subr.mxu0 0.0
  %1220 = vmatpush2.msra.mxu0 0.0
  %1221 = vmatprep.mubr.f32.mxu0 0.0
  %1222 = vmatmul.mubr.f32.gmra.mxu0 %v1152
  %v1223 = vpop.f32.mrf.mxu0
  %v1224 = vadd.f32 0.0, %v1223
  %v1225 = vpop.f32.mrf.mxu0
  %v1226 = vadd.f32 0.0, %v1225
  %1227 = vmatprep.mubr.f32.mxu0 0.0
  %1228 = vmatmul.mubr.f32.gmra.mxu0 %v1155
  %v1229 = vpop.f32.mrf.mxu0
  %v1230 = vadd.f32 0.0, %v1229
  %v1231 = vpop.f32.mrf.mxu0
  %v1232 = vadd.f32 0.0, %v1231
  %1233 = vdwg.mxu0
  %v1234 = vxor.u32 %v1224, 2147483648
  %v1235 = vxor.u32 %v1230, 2147483648
  %v1236 = vmul.f32 %v1234, 1.442695
  %v1237 = vpow.pop %v1236
  %v1238 = vmul.f32 %v1235, 1.442695
  %v1239 = vpow.pop %v1238
  %v1240 = vadd.f32 %v1237, 1.0
  %v1241 = vadd.f32 %v1239, 1.0
  %v1242 = vrcp.pop %v1240
  %v1243 = vmul.f32 1.0, %v1242
  %v1244 = vrcp.pop %v1241
  %v1245 = vmul.f32 1.0, %v1244
  %v1246 = vmul.f32 %v1224, %v1243
  %v1247 = vmul.f32 %v1230, %v1245
  %v1248 = vmul.f32 %v1246, %v1226
  %v1249 = vmul.f32 %v1247, %v1232
  %v1250 = vld [vmem:[%s10] sm:$0xff]
  %v1251 = vld [vmem:[%s10 + $0x8] sm:$0xff]
  %v1252 = vld [vmem:[%s10 + $0x10] sm:$0xff]
  %v1253 = vld [vmem:[%s10 + $0x18] sm:$0xff]
  %v1254 = vld [vmem:[%s10 + $0x20] sm:$0xff]
  %v1255 = vld [vmem:[%s10 + $0x28] sm:$0xff]
  %v1256 = vld [vmem:[%s10 + $0x30] sm:$0xff]
  %v1257 = vld [vmem:[%s10 + $0x38] sm:$0xff]
  %v1258 = vld [vmem:[%s10 + $0x40] sm:$0xff]
  %v1259 = vld [vmem:[%s10 + $0x48] sm:$0xff]
  %v1260 = vld [vmem:[%s10 + $0x50] sm:$0xff]
  %v1261 = vld [vmem:[%s10 + $0x58] sm:$0xff]
  %v1262 = vld [vmem:[%s10 + $0x60] sm:$0xff]
  %v1263 = vld [vmem:[%s10 + $0x68] sm:$0xff]
  %v1264 = vld [vmem:[%s10 + $0x70] sm:$0xff]
  %v1265 = vld [vmem:[%s10 + $0x78] sm:$0xff]
  %1266 = vmatprep.subr.mxu0 0.0
  %1267 = vmatpush1.msra.mxu0 %v1265
  %1268 = vmatprep.subr.mxu0 0.0
  %1269 = vmatpush1.msra.mxu0 %v1264
  %1270 = vmatprep.subr.mxu0 0.0
  %1271 = vmatpush1.msra.mxu0 %v1263
  %1272 = vmatprep.subr.mxu0 0.0
  %1273 = vmatpush1.msra.mxu0 %v1262
  %1274 = vmatprep.subr.mxu0 0.0
  %1275 = vmatpush1.msra.mxu0 %v1261
  %1276 = vmatprep.subr.mxu0 0.0
  %1277 = vmatpush1.msra.mxu0 %v1260
  %1278 = vmatprep.subr.mxu0 0.0
  %1279 = vmatpush1.msra.mxu0 %v1259
  %1280 = vmatprep.subr.mxu0 0.0
  %1281 = vmatpush1.msra.mxu0 %v1258
  %1282 = vmatprep.subr.mxu0 0.0
  %1283 = vmatpush1.msra.mxu0 %v1257
  %1284 = vmatprep.subr.mxu0 0.0
  %1285 = vmatpush1.msra.mxu0 %v1256
  %1286 = vmatprep.subr.mxu0 0.0
  %1287 = vmatpush1.msra.mxu0 %v1255
  %1288 = vmatprep.subr.mxu0 0.0
  %1289 = vmatpush1.msra.mxu0 %v1254
  %1290 = vmatprep.subr.mxu0 0.0
  %1291 = vmatpush1.msra.mxu0 %v1253
  %1292 = vmatprep.subr.mxu0 0.0
  %1293 = vmatpush1.msra.mxu0 %v1252
  %1294 = vmatprep.subr.mxu0 0.0
  %1295 = vmatpush1.msra.mxu0 %v1251
  %1296 = vmatprep.subr.mxu0 0.0
  %1297 = vmatpush1.msra.mxu0 %v1250
  %1298 = vmatprep.subr.mxu0 0.0
  %1299 = vmatpush2.msra.mxu0 0.0
  %1300 = vmatprep.subr.mxu0 0.0
  %1301 = vmatpush2.msra.mxu0 0.0
  %1302 = vmatprep.subr.mxu0 0.0
  %1303 = vmatpush2.msra.mxu0 0.0
  %1304 = vmatprep.subr.mxu0 0.0
  %1305 = vmatpush2.msra.mxu0 0.0
  %1306 = vmatprep.subr.mxu0 0.0
  %1307 = vmatpush2.msra.mxu0 0.0
  %1308 = vmatprep.subr.mxu0 0.0
  %1309 = vmatpush2.msra.mxu0 0.0
  %1310 = vmatprep.subr.mxu0 0.0
  %1311 = vmatpush2.msra.mxu0 0.0
  %1312 = vmatprep.subr.mxu0 0.0
  %1313 = vmatpush2.msra.mxu0 0.0
  %1314 = vmatprep.subr.mxu0 0.0
  %1315 = vmatpush2.msra.mxu0 0.0
  %1316 = vmatprep.subr.mxu0 0.0
  %1317 = vmatpush2.msra.mxu0 0.0
  %1318 = vmatprep.subr.mxu0 0.0
  %1319 = vmatpush2.msra.mxu0 0.0
  %1320 = vmatprep.subr.mxu0 0.0
  %1321 = vmatpush2.msra.mxu0 0.0
  %1322 = vmatprep.subr.mxu0 0.0
  %1323 = vmatpush2.msra.mxu0 0.0
  %1324 = vmatprep.subr.mxu0 0.0
  %1325 = vmatpush2.msra.mxu0 0.0
  %1326 = vmatprep.subr.mxu0 0.0
  %1327 = vmatpush2.msra.mxu0 0.0
  %1328 = vmatprep.subr.mxu0 0.0
  %1329 = vmatpush2.msra.mxu0 0.0
  %1330 = vmatprep.mubr.f32.mxu0 0.0
  %1331 = vmatmul.mubr.f32.gmra.mxu0 %v1248
  %v1332 = vpop.f32.mrf.mxu0
  %v1333 = vadd.f32 0.0, %v1332
  %v1334 = vpop.f32.mrf.mxu0
  %1335 = vmatprep.mubr.f32.mxu0 0.0
  %1336 = vmatmul.mubr.f32.gmra.mxu0 %v1249
  %v1337 = vpop.f32.mrf.mxu0
  %v1338 = vadd.f32 0.0, %v1337
  %v1339 = vpop.f32.mrf.mxu0
  %1340 = vdwg.mxu0
  %v1341 = vadd.f32 %v1108, %v1333
  %v1342 = vadd.f32 %v1109, %v1338
  %1343 = vst.msk [vmem:[%s11] sm:$0xff] %vm42, %v1341
  %1344 = vst.msk [vmem:[%s11 + $0x8] sm:$0xff] %vm42, %v1342
  // Predicated region
  $region46: #{llama3_forward_pallas.3} parent=0 // pred_check
    _
  $region47: #{llama3_forward_pallas.3} parent=0 // pred_check_branch
    %1346 = sbr.rel (0) target = $region49
  $region48: #{llama3_forward_pallas.3} parent=0 // pred_region
    _
  $region49: #{llama3_forward_pallas.3} parent=0 // pred_fallthru
    _
  // Predicated region
  $region50: #{llama3_forward_pallas.3} parent=0 // pred_check
    _
  $region51: #{llama3_forward_pallas.3} parent=0 // pred_check_branch
    %1348 = sbr.rel (0) target = $region53
  $region52: #{llama3_forward_pallas.3} parent=0 // pred_region
    _
  $region53: #{llama3_forward_pallas.3} parent=0 // pred_fallthru
    _

</llo_original>
